<compile_context>
chip_gen: v7x
topology: tpu7x:2x2x1
jax: 0.10.0
libtpu: 0.0.40
codegen_flags: <defaults>
</compile_context>

<pallas_src>
import jax
import jax.numpy as jnp
from jax.experimental import pallas as pl
from jax.experimental.pallas import tpu as pltpu

# --- matcher "parameters" (deterministic, from __init__ semantics) ----------
COST_CLASS = 1.0
COST_BBOX = 1.0
COST_GIOU = 1.0
USE_FOCAL = True
FOCAL_ALPHA = 0.25
FOCAL_GAMMA = 2.0        # gamma == 2 -> explicit squares instead of jnp.power
OTA_K = 5
CENTER_RADIUS = 2.5
_EPS = 1e-9

# Conservative per-kernel VMEM budget: fits v7x's 64 MiB per-TensorCore VMEM with
# headroom, and is plenty for v5e/v6e (128 MiB) to amortize per-step overhead.
_VMEM_BUDGET_BYTES = 48 * 1024 * 1024


def _matcher_cost_kernel(logits_t_ref, pboxes_t_ref, onehot_ref, gt_ref, rcp_sz_ref,
                         cost_ref, iou_ref, fg_ref):
    logits_t = logits_t_ref[0]        # [C, TQ]   (Q lane-dense)
    pb_t = pboxes_t_ref[0]            # [4, TQ]
    onehot = onehot_ref[0]            # [G, C]
    gt = gt_ref[0]                    # [G, 4]    xyxy abs
    rcp_sz = rcp_sz_ref[0]            # [1, 4]    1/[W,H,W,H]

    # ---------------- focal classification cost: gather FIRST ---------------
    # The one-hot matmul is an *exact* select of logits[labels[g], q] (MXU, f32);
    # the focal transform is elementwise so it commutes with the gather. Doing it
    # after the gather makes EUP/VALU work and live temporaries scale with G
    # instead of C and removes the lossy bf16 cast of the previous version.
    gl = jnp.dot(onehot, logits_t, preferred_element_type=jnp.float32)   # [G, TQ]
    prob = jax.nn.sigmoid(gl)
    one_m = 1.0 - prob
    # gamma == 2.0: explicit squares keep this on the 4-wide VALU instead of EUP pow.
    neg_cost = (1.0 - FOCAL_ALPHA) * (prob * prob) * (-jnp.log(one_m + 1e-8))
    pos_cost = FOCAL_ALPHA * (one_m * one_m) * (-jnp.log(prob + 1e-8))
    cost_class = pos_cost - neg_cost                                      # [G, TQ]

    # ---------------- pairwise geometry (G on sublanes, Q on lanes) ---------
    px0 = pb_t[0:1, :]; py0 = pb_t[1:2, :]; px1 = pb_t[2:3, :]; py1 = pb_t[3:4, :]  # [1,TQ]
    gx0 = gt[:, 0:1]; gy0 = gt[:, 1:2]; gx1 = gt[:, 2:3]; gy1 = gt[:, 3:4]          # [G,1]

    # pairwise IoU / GIoU (eps-guarded; approx reciprocal instead of divides)
    area_p = (px1 - px0) * (py1 - py0)                                # [1,TQ]
    area_g = (gx1 - gx0) * (gy1 - gy0)                                # [G,1]
    ix0 = jnp.maximum(px0, gx0); iy0 = jnp.maximum(py0, gy0)
    ix1 = jnp.minimum(px1, gx1); iy1 = jnp.minimum(py1, gy1)
    inter = jnp.maximum(ix1 - ix0, 0.0) * jnp.maximum(iy1 - iy0, 0.0)  # [G,TQ]
    union = area_p + area_g - inter
    iou = inter * pl.reciprocal(union + _EPS, approx=True)             # [G,TQ]
    ex0 = jnp.minimum(px0, gx0); ey0 = jnp.minimum(py0, gy0)
    ex1 = jnp.maximum(px1, gx1); ey1 = jnp.maximum(py1, gy1)
    earea = jnp.maximum(ex1 - ex0, 0.0) * jnp.maximum(ey1 - ey0, 0.0)
    giou = iou - (earea - union) * pl.reciprocal(earea + _EPS, approx=True)
    cost_giou = -giou

    # L1 cdist on normalized coords; pred & gt are both divided by the same image size,
    # so |p/s - g/s| = |p - g| * (1/s) — multiply by the precomputed reciprocal.
    rx0 = rcp_sz[0:1, 0:1]; ry0 = rcp_sz[0:1, 1:2]
    rx1 = rcp_sz[0:1, 2:3]; ry1 = rcp_sz[0:1, 3:4]
    cost_bbox = (jnp.abs(px0 - gx0) * rx0 + jnp.abs(py0 - gy0) * ry0 +
                 jnp.abs(px1 - gx1) * rx1 + jnp.abs(py1 - gy1) * ry1)  # [G,TQ]

    # in-box / in-center information (get_in_boxes_info)
    acx = 0.5 * (px0 + px1)                                            # [1,TQ]
    acy = 0.5 * (py0 + py1)
    in_box = (acx > gx0) & (acx < gx1) & (acy > gy0) & (acy < gy1)     # [G,TQ]
    gcx = 0.5 * (gx0 + gx1); gcy = 0.5 * (gy0 + gy1)
    gw = gx1 - gx0; gh = gy1 - gy0
    in_ctr = ((acx > gcx - CENTER_RADIUS * gw) & (acx < gcx + CENTER_RADIUS * gw) &
              (acy > gcy - CENTER_RADIUS * gh) & (acy < gcy + CENTER_RADIUS * gh))
    in_box_f = in_box.astype(jnp.float32)
    in_ctr_f = in_ctr.astype(jnp.float32)
    in_box_any = jnp.sum(in_box_f, axis=0, keepdims=True) > 0.0        # [1,TQ]
    in_ctr_any = jnp.sum(in_ctr_f, axis=0, keepdims=True) > 0.0
    fg = (in_box_any | in_ctr_any).astype(jnp.float32)                 # [1,TQ]
    in_both = in_box_f * in_ctr_f                                      # [G,TQ]

    cost = (COST_BBOX * cost_bbox + COST_CLASS * cost_class + COST_GIOU * cost_giou
            + 100.0 * (1.0 - in_both)
            + 10000.0 * (1.0 - fg))                                    # [G,TQ]

    cost_ref[0] = cost
    iou_ref[0] = iou
    fg_ref[0] = fg


def _pick_tq(q_padded, c, g, b):
    """Largest lane-dense tile that divides padded Q, fits the VMEM budget
    (inputs/outputs double-buffered + live [G,TQ] temporaries), and leaves
    >= 2 grid steps so both v7x TensorCores get work."""
    assert q_padded % 128 == 0
    candidates = [t for t in (2048, 1024, 512, 256, 128) if q_padded % t == 0]
    if not candidates:
        candidates = [128]
    tq = candidates[-1]
    for t in candidates:
        est = 4 * (2 * (c + 4) * t          # double-buffered logits + boxes inputs
                   + 2 * (2 * g + 1) * t    # double-buffered cost/iou/fg outputs
                   + 8 * g * t              # live [G,TQ]-ish temporaries in the body
                   + (g * c + 4 * g + 4))   # resident onehot / gt / rcp blocks
        if est <= _VMEM_BUDGET_BYTES:
            tq = t
            break
    # keep the grid >= 2 steps for v7x's two TensorCores (dims are "parallel")
    while b * (q_padded // tq) < 2 and tq > 128:
        tq //= 2
    return tq


@jax.jit
def matcher_cost_pallas(logits_t, pboxes_t, onehot, gt_boxes, rcp_imgsz):
    B, C, Q = logits_t.shape
    G = gt_boxes.shape[1]
    TQ = _pick_tq(Q, C, G, B)
    grid = (B, Q // TQ)

    in_specs = [
        pl.BlockSpec((1, C, TQ), lambda b, q: (b, 0, q)),   # logits (transposed)
        pl.BlockSpec((1, 4, TQ), lambda b, q: (b, 0, q)),   # pred boxes (transposed)
        pl.BlockSpec((1, G, C), lambda b, q: (b, 0, 0)),    # class one-hot (resident over Q)
        pl.BlockSpec((1, G, 4), lambda b, q: (b, 0, 0)),    # gt boxes (resident over Q)
        pl.BlockSpec((1, 1, 4), lambda b, q: (b, 0, 0)),    # reciprocal image size
    ]
    out_specs = (
        pl.BlockSpec((1, G, TQ), lambda b, q: (b, 0, q)),
        pl.BlockSpec((1, G, TQ), lambda b, q: (b, 0, q)),
        pl.BlockSpec((1, 1, TQ), lambda b, q: (b, 0, q)),
    )
    out_shapes = (
        jax.ShapeDtypeStruct((B, G, Q), jnp.float32),   # cost  [B, G, Q]  (Q lane-dense)
        jax.ShapeDtypeStruct((B, G, Q), jnp.float32),   # pairwise iou
        jax.ShapeDtypeStruct((B, 1, Q), jnp.float32),   # fg mask
    )
    return pl.pallas_call(
        _matcher_cost_kernel,
        out_shape=out_shapes,
        grid=grid,
        in_specs=in_specs,
        out_specs=out_specs,
        compiler_params=pltpu.CompilerParams(
            dimension_semantics=("parallel", "parallel"),
            vmem_limit_bytes=_VMEM_BUDGET_BYTES),
    )(logits_t, pboxes_t, onehot, gt_boxes, rcp_imgsz)


def dynamic_k_matching_jax(cost_gq, iou_gq, ota_k=OTA_K):
    """Static-shape JAX port of dynamic_k_matching; inputs are [G, Q] (gt-major)."""
    G, Q = cost_gq.shape
    # dynamic-k from summed top-k ious per gt (torch.clamp(sum.int(), min=1))
    topk_ious, _ = jax.lax.top_k(iou_gq, ota_k)                        # [G, k]
    dynamic_ks = jnp.maximum(jnp.sum(topk_ious, axis=1).astype(jnp.int32), 1)
    # per-gt: mark the dynamic_ks[g] smallest-cost queries
    order = jnp.argsort(cost_gq, axis=1)
    ranks = jnp.argsort(order, axis=1)                                 # rank of each query per gt
    matching = (ranks < dynamic_ks[:, None]).astype(jnp.float32)       # [G, Q]
    # de-duplicate queries matched to >1 gt: keep only the min-cost gt
    anchor_matching_gt = matching.sum(axis=0)                          # [Q]
    cost_argmin = jnp.argmin(cost_gq, axis=0)                          # [Q]
    dedup = (jnp.arange(G)[:, None] == cost_argmin[None, :]).astype(jnp.float32)
    matching = jnp.where((anchor_matching_gt > 1.0)[None, :], dedup, matching)
    # TODO(synk): the data-dependent `while (matching.sum(0)==0).any()` rescue loop
    # (re-seeding empty gt columns with +100000 penalties) is not ported.
    selected_query = matching.sum(axis=0) > 0.0                        # [Q] bool
    gt_indices = jnp.argmax(matching, axis=0)                          # [Q] (valid where selected)
    cost_inf = jnp.where(matching == 0.0, jnp.inf, cost_gq)
    matched_query_id = jnp.argmin(cost_inf, axis=1)                    # [G]
    return selected_query, gt_indices, matched_query_id


def hungarian_matcher_dynamic_k(pred_logits, pred_boxes, labels, gt_boxes_xyxy,
                                image_size_xyxy):
    """Full forward: Pallas cost/IoU kernel + vmapped JAX dynamic-k bookkeeping."""
    B, Q, C = pred_logits.shape
    pred_logits = pred_logits.astype(jnp.float32)
    pred_boxes = pred_boxes.astype(jnp.float32)

    # Pad Q to a lane multiple (128) so every kernel load/store stays full-width
    # (unmasked vst). Padded queries are far-away background boxes with very negative
    # logits: fg=0, iou~0, cost >> real queries, so they never get matched.
    Qp = ((Q + 127) // 128) * 128
    if Qp != Q:
        pad = Qp - Q
        pred_logits = jnp.pad(pred_logits, ((0, 0), (0, pad), (0, 0)),
                              constant_values=-20.0)
        pad_box = jnp.broadcast_to(
            jnp.array([-1.0e5, -1.0e5, -1.0e5 + 1.0, -1.0e5 + 1.0], dtype=jnp.float32),
            (B, pad, 4))
        pred_boxes = jnp.concatenate([pred_boxes, pad_box], axis=1)

    # glue: lane-dense (Q-last) layouts + one-hot class gather matrix + reciprocal image size
    logits_t = jnp.transpose(pred_logits, (0, 2, 1))                        # [B, C, Qp]
    pboxes_t = jnp.transpose(pred_boxes, (0, 2, 1))                         # [B, 4, Qp]
    onehot = jax.nn.one_hot(labels, C, dtype=jnp.float32)                   # [B, G, C]
    gt = gt_boxes_xyxy.astype(jnp.float32)                                  # [B, G, 4]
    rcp_imgsz = (1.0 / image_size_xyxy.astype(jnp.float32)).reshape(B, 1, 4)

    cost, iou, fg = matcher_cost_pallas(logits_t, pboxes_t, onehot, gt, rcp_imgsz)

    sel, gt_idx, matched_qid = jax.vmap(dynamic_k_matching_jax)(cost, iou)

    # drop padded query columns before returning (matched_qid indexes real queries only,
    # since padded queries carry +10000/+100 penalties and are never matched)
    return ((sel[:, :Q], gt_idx[:, :Q], matched_qid),
            cost[:, :, :Q], iou[:, :, :Q], fg[:, :, :Q])


if __name__ == "__main__":
    key = jax.random.PRNGKey(0)
    B, Q, C, G = 2, 200, 16, 8          # Q=200 exercises the pad-to-256 lane-dense path
    IMG_W, IMG_H = 128.0, 128.0

    k1, k2, k3, k4, k5 = jax.random.split(key, 5)
    pred_logits = jax.random.normal(k1, (B, Q, C), dtype=jnp.float32)

    # predicted boxes: valid abs xyxy inside the image
    pc = jax.random.uniform(k2, (B, Q, 2), minval=10.0, maxval=110.0)
    ps = jax.random.uniform(k3, (B, Q, 2), minval=5.0, maxval=30.0)
    pred_boxes = jnp.concatenate([pc - 0.5 * ps, pc + 0.5 * ps], axis=-1)

    # gt boxes: valid abs xyxy
    gc = jax.random.uniform(k4, (B, G, 2), minval=20.0, maxval=100.0)
    gs = jax.random.uniform(k5, (B, G, 2), minval=10.0, maxval=40.0)
    gt_boxes_xyxy = jnp.concatenate([gc - 0.5 * gs, gc + 0.5 * gs], axis=-1)

    labels = jax.random.randint(jax.random.PRNGKey(7), (B, G), 0, C)
    image_size_xyxy = jnp.tile(jnp.array([[IMG_W, IMG_H, IMG_W, IMG_H]],
                                         dtype=jnp.float32), (B, 1))

    (sel, gt_idx, matched_qid), cost, iou, fg = hungarian_matcher_dynamic_k(
        pred_logits, pred_boxes, labels, gt_boxes_xyxy, image_size_xyxy)

    cost = jax.block_until_ready(cost)
    iou = jax.block_until_ready(iou)
    fg = jax.block_until_ready(fg)
    jax.block_until_ready(sel)
    jax.block_until_ready(gt_idx)
    jax.block_until_ready(matched_qid)

    # sanity: all kernel outputs finite (eps-guarded IoU/GIoU) and matched ids in range
    assert bool(jnp.all(jnp.isfinite(cost))), "non-finite cost"
    assert bool(jnp.all(jnp.isfinite(iou))), "non-finite iou"
    assert cost.shape == (B, G, Q) and iou.shape == (B, G, Q) and fg.shape == (B, 1, Q)
    assert bool(jnp.all(matched_qid < Q)), "matched a padded query"
    print("KERNEL_OK")
</pallas_src>

<mosaic_0001>
module attributes {stable_mosaic.version = 11 : i64} {
  func.func @_matcher_cost_kernel(%arg0: i32, %arg1: i32, %arg2: memref<1x16x256xf32, #tpu.memory_space<vmem>>, %arg3: memref<1x4x256xf32, #tpu.memory_space<vmem>>, %arg4: memref<1x8x16xf32, #tpu.memory_space<vmem>>, %arg5: memref<1x8x4xf32, #tpu.memory_space<vmem>>, %arg6: memref<1x1x4xf32, #tpu.memory_space<vmem>>, %arg7: memref<1x8x256xf32, #tpu.memory_space<vmem>>, %arg8: memref<1x8x256xf32, #tpu.memory_space<vmem>>, %arg9: memref<1x1x256xf32, #tpu.memory_space<vmem>>) attributes {dimension_semantics = [#tpu.dimension_semantics<parallel>, #tpu.dimension_semantics<parallel>], iteration_bounds = array<i64: 2, 1>, scalar_prefetch = 0 : i64, scratch_operands = 0 : i64, tpu.core_type = #tpu.core_type<tc>, window_params = [{transform_indices = @transform_0, window_bounds = array<i64: 1, 16, 256>}, {transform_indices = @transform_1, window_bounds = array<i64: 1, 4, 256>}, {transform_indices = @transform_2, window_bounds = array<i64: 1, 8, 16>}, {transform_indices = @transform_3, window_bounds = array<i64: 1, 8, 4>}, {transform_indices = @transform_4, window_bounds = array<i64: 1, 1, 4>}, {transform_indices = @transform_5, window_bounds = array<i64: 1, 8, 256>}, {transform_indices = @transform_6, window_bounds = array<i64: 1, 8, 256>}, {transform_indices = @transform_7, window_bounds = array<i64: 1, 1, 256>}]} {
    %c0 = arith.constant 0 : index
    %c0_0 = arith.constant 0 : index
    %c0_1 = arith.constant 0 : index
    %0 = vector.load %arg2[%c0, %c0_0, %c0_1] : memref<1x16x256xf32, #tpu.memory_space<vmem>>, vector<1x16x256xf32>
    %1 = vector.shape_cast %0 : vector<1x16x256xf32> to vector<16x256xf32>
    %c0_2 = arith.constant 0 : index
    %c0_3 = arith.constant 0 : index
    %c0_4 = arith.constant 0 : index
    %2 = vector.load %arg3[%c0_2, %c0_3, %c0_4] : memref<1x4x256xf32, #tpu.memory_space<vmem>>, vector<1x4x256xf32>
    %3 = vector.shape_cast %2 : vector<1x4x256xf32> to vector<4x256xf32>
    %c0_5 = arith.constant 0 : index
    %c0_6 = arith.constant 0 : index
    %c0_7 = arith.constant 0 : index
    %4 = vector.load %arg4[%c0_5, %c0_6, %c0_7] : memref<1x8x16xf32, #tpu.memory_space<vmem>>, vector<1x8x16xf32>
    %5 = vector.shape_cast %4 : vector<1x8x16xf32> to vector<8x16xf32>
    %c0_8 = arith.constant 0 : index
    %c0_9 = arith.constant 0 : index
    %c0_10 = arith.constant 0 : index
    %6 = vector.load %arg5[%c0_8, %c0_9, %c0_10] : memref<1x8x4xf32, #tpu.memory_space<vmem>>, vector<1x8x4xf32>
    %7 = vector.shape_cast %6 : vector<1x8x4xf32> to vector<8x4xf32>
    %c0_11 = arith.constant 0 : index
    %c0_12 = arith.constant 0 : index
    %c0_13 = arith.constant 0 : index
    %8 = vector.load %arg6[%c0_11, %c0_12, %c0_13] : memref<1x1x4xf32, #tpu.memory_space<vmem>>, vector<1x1x4xf32>
    %9 = vector.shape_cast %8 : vector<1x1x4xf32> to vector<1x4xf32>
    %cst = arith.constant dense<0.000000e+00> : vector<8x256xf32>
    %10 = tpu.matmul %5, %1, %cst {dimension_numbers = #tpu.dot_dimension_numbers<[1], [0], [0], [1], [0, 0, 1, 1], [], []>} : vector<8x16xf32>, vector<16x256xf32>, vector<8x256xf32> -> vector<8x256xf32>
    %11 = arith.negf %10 : vector<8x256xf32>
    %12 = math.exp %11 : vector<8x256xf32>
    %cst_14 = arith.constant 1.000000e+00 : f32
    %13 = vector.broadcast %cst_14 : f32 to vector<8x256xf32>
    %14 = arith.addf %13, %12 : vector<8x256xf32>
    %15 = arith.divf %13, %14 : vector<8x256xf32>
    %cst_15 = arith.constant 1.000000e+00 : f32
    %16 = vector.broadcast %cst_15 : f32 to vector<8x256xf32>
    %17 = arith.subf %16, %15 : vector<8x256xf32>
    %18 = arith.mulf %15, %15 : vector<8x256xf32>
    %cst_16 = arith.constant 7.500000e-01 : f32
    %19 = vector.broadcast %cst_16 : f32 to vector<8x256xf32>
    %20 = arith.mulf %19, %18 : vector<8x256xf32>
    %cst_17 = arith.constant 9.99999993E-9 : f32
    %21 = vector.broadcast %cst_17 : f32 to vector<8x256xf32>
    %22 = arith.addf %17, %21 : vector<8x256xf32>
    %23 = math.log %22 : vector<8x256xf32>
    %cst_18 = arith.constant 0.000000e+00 : f32
    %24 = vector.broadcast %cst_18 : f32 to vector<8x256xf32>
    %25 = arith.subf %24, %23 : vector<8x256xf32>
    %26 = arith.mulf %20, %25 : vector<8x256xf32>
    %27 = arith.mulf %17, %17 : vector<8x256xf32>
    %cst_19 = arith.constant 2.500000e-01 : f32
    %28 = vector.broadcast %cst_19 : f32 to vector<8x256xf32>
    %29 = arith.mulf %28, %27 : vector<8x256xf32>
    %cst_20 = arith.constant 9.99999993E-9 : f32
    %30 = vector.broadcast %cst_20 : f32 to vector<8x256xf32>
    %31 = arith.addf %15, %30 : vector<8x256xf32>
    %32 = math.log %31 : vector<8x256xf32>
    %cst_21 = arith.constant 0.000000e+00 : f32
    %33 = vector.broadcast %cst_21 : f32 to vector<8x256xf32>
    %34 = arith.subf %33, %32 : vector<8x256xf32>
    %35 = arith.mulf %29, %34 : vector<8x256xf32>
    %36 = arith.subf %35, %26 : vector<8x256xf32>
    %37 = vector.extract_strided_slice %3 {offsets = [0, 0], sizes = [1, 256], strides = [1, 1]} : vector<4x256xf32> to vector<1x256xf32>
    %38 = vector.extract_strided_slice %3 {offsets = [1, 0], sizes = [1, 256], strides = [1, 1]} : vector<4x256xf32> to vector<1x256xf32>
    %39 = vector.extract_strided_slice %3 {offsets = [2, 0], sizes = [1, 256], strides = [1, 1]} : vector<4x256xf32> to vector<1x256xf32>
    %40 = vector.extract_strided_slice %3 {offsets = [3, 0], sizes = [1, 256], strides = [1, 1]} : vector<4x256xf32> to vector<1x256xf32>
    %41 = vector.extract_strided_slice %7 {offsets = [0, 0], sizes = [8, 1], strides = [1, 1]} : vector<8x4xf32> to vector<8x1xf32>
    %42 = vector.extract_strided_slice %7 {offsets = [0, 1], sizes = [8, 1], strides = [1, 1]} : vector<8x4xf32> to vector<8x1xf32>
    %43 = vector.extract_strided_slice %7 {offsets = [0, 2], sizes = [8, 1], strides = [1, 1]} : vector<8x4xf32> to vector<8x1xf32>
    %44 = vector.extract_strided_slice %7 {offsets = [0, 3], sizes = [8, 1], strides = [1, 1]} : vector<8x4xf32> to vector<8x1xf32>
    %45 = arith.subf %39, %37 : vector<1x256xf32>
    %46 = arith.subf %40, %38 : vector<1x256xf32>
    %47 = arith.mulf %45, %46 : vector<1x256xf32>
    %48 = arith.subf %43, %41 : vector<8x1xf32>
    %49 = arith.subf %44, %42 : vector<8x1xf32>
    %50 = arith.mulf %48, %49 : vector<8x1xf32>
    %51 = vector.broadcast %37 : vector<1x256xf32> to vector<8x256xf32>
    %52 = vector.broadcast %41 : vector<8x1xf32> to vector<8x256xf32>
    %53 = arith.maximumf %51, %52 : vector<8x256xf32>
    %54 = vector.broadcast %38 : vector<1x256xf32> to vector<8x256xf32>
    %55 = vector.broadcast %42 : vector<8x1xf32> to vector<8x256xf32>
    %56 = arith.maximumf %54, %55 : vector<8x256xf32>
    %57 = vector.broadcast %39 : vector<1x256xf32> to vector<8x256xf32>
    %58 = vector.broadcast %43 : vector<8x1xf32> to vector<8x256xf32>
    %59 = arith.minimumf %57, %58 : vector<8x256xf32>
    %60 = vector.broadcast %40 : vector<1x256xf32> to vector<8x256xf32>
    %61 = vector.broadcast %44 : vector<8x1xf32> to vector<8x256xf32>
    %62 = arith.minimumf %60, %61 : vector<8x256xf32>
    %63 = arith.subf %59, %53 : vector<8x256xf32>
    %cst_22 = arith.constant 0.000000e+00 : f32
    %64 = vector.broadcast %cst_22 : f32 to vector<8x256xf32>
    %65 = arith.maximumf %63, %64 : vector<8x256xf32>
    %66 = arith.subf %62, %56 : vector<8x256xf32>
    %cst_23 = arith.constant 0.000000e+00 : f32
    %67 = vector.broadcast %cst_23 : f32 to vector<8x256xf32>
    %68 = arith.maximumf %66, %67 : vector<8x256xf32>
    %69 = arith.mulf %65, %68 : vector<8x256xf32>
    %70 = vector.broadcast %47 : vector<1x256xf32> to vector<8x256xf32>
    %71 = vector.broadcast %50 : vector<8x1xf32> to vector<8x256xf32>
    %72 = arith.addf %70, %71 : vector<8x256xf32>
    %73 = arith.subf %72, %69 : vector<8x256xf32>
    %cst_24 = arith.constant 9.99999971E-10 : f32
    %74 = vector.broadcast %cst_24 : f32 to vector<8x256xf32>
    %75 = arith.addf %73, %74 : vector<8x256xf32>
    %76 = tpu.reciprocal %75 {approx = true} : vector<8x256xf32> -> vector<8x256xf32>
    %77 = arith.mulf %69, %76 : vector<8x256xf32>
    %78 = vector.broadcast %37 : vector<1x256xf32> to vector<8x256xf32>
    %79 = vector.broadcast %41 : vector<8x1xf32> to vector<8x256xf32>
    %80 = arith.minimumf %78, %79 : vector<8x256xf32>
    %81 = vector.broadcast %38 : vector<1x256xf32> to vector<8x256xf32>
    %82 = vector.broadcast %42 : vector<8x1xf32> to vector<8x256xf32>
    %83 = arith.minimumf %81, %82 : vector<8x256xf32>
    %84 = vector.broadcast %39 : vector<1x256xf32> to vector<8x256xf32>
    %85 = vector.broadcast %43 : vector<8x1xf32> to vector<8x256xf32>
    %86 = arith.maximumf %84, %85 : vector<8x256xf32>
    %87 = vector.broadcast %40 : vector<1x256xf32> to vector<8x256xf32>
    %88 = vector.broadcast %44 : vector<8x1xf32> to vector<8x256xf32>
    %89 = arith.maximumf %87, %88 : vector<8x256xf32>
    %90 = arith.subf %86, %80 : vector<8x256xf32>
    %cst_25 = arith.constant 0.000000e+00 : f32
    %91 = vector.broadcast %cst_25 : f32 to vector<8x256xf32>
    %92 = arith.maximumf %90, %91 : vector<8x256xf32>
    %93 = arith.subf %89, %83 : vector<8x256xf32>
    %cst_26 = arith.constant 0.000000e+00 : f32
    %94 = vector.broadcast %cst_26 : f32 to vector<8x256xf32>
    %95 = arith.maximumf %93, %94 : vector<8x256xf32>
    %96 = arith.mulf %92, %95 : vector<8x256xf32>
    %97 = arith.subf %96, %73 : vector<8x256xf32>
    %cst_27 = arith.constant 9.99999971E-10 : f32
    %98 = vector.broadcast %cst_27 : f32 to vector<8x256xf32>
    %99 = arith.addf %96, %98 : vector<8x256xf32>
    %100 = tpu.reciprocal %99 {approx = true} : vector<8x256xf32> -> vector<8x256xf32>
    %101 = arith.mulf %97, %100 : vector<8x256xf32>
    %102 = arith.subf %77, %101 : vector<8x256xf32>
    %cst_28 = arith.constant 0.000000e+00 : f32
    %103 = vector.broadcast %cst_28 : f32 to vector<8x256xf32>
    %104 = arith.subf %103, %102 : vector<8x256xf32>
    %105 = vector.extract_strided_slice %9 {offsets = [0, 0], sizes = [1, 1], strides = [1, 1]} : vector<1x4xf32> to vector<1x1xf32>
    %106 = vector.extract_strided_slice %9 {offsets = [0, 1], sizes = [1, 1], strides = [1, 1]} : vector<1x4xf32> to vector<1x1xf32>
    %107 = vector.extract_strided_slice %9 {offsets = [0, 2], sizes = [1, 1], strides = [1, 1]} : vector<1x4xf32> to vector<1x1xf32>
    %108 = vector.extract_strided_slice %9 {offsets = [0, 3], sizes = [1, 1], strides = [1, 1]} : vector<1x4xf32> to vector<1x1xf32>
    %109 = vector.broadcast %37 : vector<1x256xf32> to vector<8x256xf32>
    %110 = vector.broadcast %41 : vector<8x1xf32> to vector<8x256xf32>
    %111 = arith.subf %109, %110 : vector<8x256xf32>
    %112 = math.absf %111 : vector<8x256xf32>
    %113 = vector.broadcast %105 : vector<1x1xf32> to vector<8x256xf32>
    %114 = arith.mulf %112, %113 : vector<8x256xf32>
    %115 = vector.broadcast %38 : vector<1x256xf32> to vector<8x256xf32>
    %116 = vector.broadcast %42 : vector<8x1xf32> to vector<8x256xf32>
    %117 = arith.subf %115, %116 : vector<8x256xf32>
    %118 = math.absf %117 : vector<8x256xf32>
    %119 = vector.broadcast %106 : vector<1x1xf32> to vector<8x256xf32>
    %120 = arith.mulf %118, %119 : vector<8x256xf32>
    %121 = arith.addf %114, %120 : vector<8x256xf32>
    %122 = vector.broadcast %39 : vector<1x256xf32> to vector<8x256xf32>
    %123 = vector.broadcast %43 : vector<8x1xf32> to vector<8x256xf32>
    %124 = arith.subf %122, %123 : vector<8x256xf32>
    %125 = math.absf %124 : vector<8x256xf32>
    %126 = vector.broadcast %107 : vector<1x1xf32> to vector<8x256xf32>
    %127 = arith.mulf %125, %126 : vector<8x256xf32>
    %128 = arith.addf %121, %127 : vector<8x256xf32>
    %129 = vector.broadcast %40 : vector<1x256xf32> to vector<8x256xf32>
    %130 = vector.broadcast %44 : vector<8x1xf32> to vector<8x256xf32>
    %131 = arith.subf %129, %130 : vector<8x256xf32>
    %132 = math.absf %131 : vector<8x256xf32>
    %133 = vector.broadcast %108 : vector<1x1xf32> to vector<8x256xf32>
    %134 = arith.mulf %132, %133 : vector<8x256xf32>
    %135 = arith.addf %128, %134 : vector<8x256xf32>
    %136 = arith.addf %37, %39 : vector<1x256xf32>
    %cst_29 = arith.constant 5.000000e-01 : f32
    %137 = vector.broadcast %cst_29 : f32 to vector<1x256xf32>
    %138 = arith.mulf %137, %136 : vector<1x256xf32>
    %139 = arith.addf %38, %40 : vector<1x256xf32>
    %cst_30 = arith.constant 5.000000e-01 : f32
    %140 = vector.broadcast %cst_30 : f32 to vector<1x256xf32>
    %141 = arith.mulf %140, %139 : vector<1x256xf32>
    %142 = vector.broadcast %138 : vector<1x256xf32> to vector<8x256xf32>
    %143 = vector.broadcast %41 : vector<8x1xf32> to vector<8x256xf32>
    %144 = arith.cmpf ogt, %142, %143 : vector<8x256xf32>
    %145 = vector.broadcast %138 : vector<1x256xf32> to vector<8x256xf32>
    %146 = vector.broadcast %43 : vector<8x1xf32> to vector<8x256xf32>
    %147 = arith.cmpf olt, %145, %146 : vector<8x256xf32>
    %148 = arith.andi %144, %147 : vector<8x256xi1>
    %149 = vector.broadcast %141 : vector<1x256xf32> to vector<8x256xf32>
    %150 = vector.broadcast %42 : vector<8x1xf32> to vector<8x256xf32>
    %151 = arith.cmpf ogt, %149, %150 : vector<8x256xf32>
    %152 = arith.andi %148, %151 : vector<8x256xi1>
    %153 = vector.broadcast %141 : vector<1x256xf32> to vector<8x256xf32>
    %154 = vector.broadcast %44 : vector<8x1xf32> to vector<8x256xf32>
    %155 = arith.cmpf olt, %153, %154 : vector<8x256xf32>
    %156 = arith.andi %152, %155 : vector<8x256xi1>
    %157 = arith.addf %41, %43 : vector<8x1xf32>
    %cst_31 = arith.constant 5.000000e-01 : f32
    %158 = vector.broadcast %cst_31 : f32 to vector<8x1xf32>
    %159 = arith.mulf %158, %157 : vector<8x1xf32>
    %160 = arith.addf %42, %44 : vector<8x1xf32>
    %cst_32 = arith.constant 5.000000e-01 : f32
    %161 = vector.broadcast %cst_32 : f32 to vector<8x1xf32>
    %162 = arith.mulf %161, %160 : vector<8x1xf32>
    %163 = arith.subf %43, %41 : vector<8x1xf32>
    %164 = arith.subf %44, %42 : vector<8x1xf32>
    %cst_33 = arith.constant 2.500000e+00 : f32
    %165 = vector.broadcast %cst_33 : f32 to vector<8x1xf32>
    %166 = arith.mulf %165, %163 : vector<8x1xf32>
    %167 = arith.subf %159, %166 : vector<8x1xf32>
    %168 = vector.broadcast %138 : vector<1x256xf32> to vector<8x256xf32>
    %169 = vector.broadcast %167 : vector<8x1xf32> to vector<8x256xf32>
    %170 = arith.cmpf ogt, %168, %169 : vector<8x256xf32>
    %cst_34 = arith.constant 2.500000e+00 : f32
    %171 = vector.broadcast %cst_34 : f32 to vector<8x1xf32>
    %172 = arith.mulf %171, %163 : vector<8x1xf32>
    %173 = arith.addf %159, %172 : vector<8x1xf32>
    %174 = vector.broadcast %138 : vector<1x256xf32> to vector<8x256xf32>
    %175 = vector.broadcast %173 : vector<8x1xf32> to vector<8x256xf32>
    %176 = arith.cmpf olt, %174, %175 : vector<8x256xf32>
    %177 = arith.andi %170, %176 : vector<8x256xi1>
    %cst_35 = arith.constant 2.500000e+00 : f32
    %178 = vector.broadcast %cst_35 : f32 to vector<8x1xf32>
    %179 = arith.mulf %178, %164 : vector<8x1xf32>
    %180 = arith.subf %162, %179 : vector<8x1xf32>
    %181 = vector.broadcast %141 : vector<1x256xf32> to vector<8x256xf32>
    %182 = vector.broadcast %180 : vector<8x1xf32> to vector<8x256xf32>
    %183 = arith.cmpf ogt, %181, %182 : vector<8x256xf32>
    %184 = arith.andi %177, %183 : vector<8x256xi1>
    %cst_36 = arith.constant 2.500000e+00 : f32
    %185 = vector.broadcast %cst_36 : f32 to vector<8x1xf32>
    %186 = arith.mulf %185, %164 : vector<8x1xf32>
    %187 = arith.addf %162, %186 : vector<8x1xf32>
    %188 = vector.broadcast %141 : vector<1x256xf32> to vector<8x256xf32>
    %189 = vector.broadcast %187 : vector<8x1xf32> to vector<8x256xf32>
    %190 = arith.cmpf olt, %188, %189 : vector<8x256xf32>
    %191 = arith.andi %184, %190 : vector<8x256xi1>
    %192 = arith.extui %156 : vector<8x256xi1> to vector<8x256xi32>
    %193 = arith.sitofp %192 : vector<8x256xi32> to vector<8x256xf32>
    %194 = arith.extui %191 : vector<8x256xi1> to vector<8x256xi32>
    %195 = arith.sitofp %194 : vector<8x256xi32> to vector<8x256xf32>
    %cst_37 = arith.constant dense<0.000000e+00> : vector<256xf32>
    %196 = vector.multi_reduction <add>, %193, %cst_37 [0] : vector<8x256xf32> to vector<256xf32>
    %197 = vector.shape_cast %196 : vector<256xf32> to vector<1x256xf32>
    %cst_38 = arith.constant 0.000000e+00 : f32
    %198 = vector.broadcast %cst_38 : f32 to vector<1x256xf32>
    %199 = arith.cmpf ogt, %197, %198 : vector<1x256xf32>
    %cst_39 = arith.constant dense<0.000000e+00> : vector<256xf32>
    %200 = vector.multi_reduction <add>, %195, %cst_39 [0] : vector<8x256xf32> to vector<256xf32>
    %201 = vector.shape_cast %200 : vector<256xf32> to vector<1x256xf32>
    %cst_40 = arith.constant 0.000000e+00 : f32
    %202 = vector.broadcast %cst_40 : f32 to vector<1x256xf32>
    %203 = arith.cmpf ogt, %201, %202 : vector<1x256xf32>
    %204 = arith.ori %199, %203 : vector<1x256xi1>
    %205 = arith.extui %204 : vector<1x256xi1> to vector<1x256xi32>
    %206 = arith.sitofp %205 : vector<1x256xi32> to vector<1x256xf32>
    %207 = arith.mulf %193, %195 : vector<8x256xf32>
    %cst_41 = arith.constant 1.000000e+00 : f32
    %208 = vector.broadcast %cst_41 : f32 to vector<8x256xf32>
    %209 = arith.mulf %208, %135 : vector<8x256xf32>
    %cst_42 = arith.constant 1.000000e+00 : f32
    %210 = vector.broadcast %cst_42 : f32 to vector<8x256xf32>
    %211 = arith.mulf %210, %36 : vector<8x256xf32>
    %212 = arith.addf %209, %211 : vector<8x256xf32>
    %cst_43 = arith.constant 1.000000e+00 : f32
    %213 = vector.broadcast %cst_43 : f32 to vector<8x256xf32>
    %214 = arith.mulf %213, %104 : vector<8x256xf32>
    %215 = arith.addf %212, %214 : vector<8x256xf32>
    %cst_44 = arith.constant 1.000000e+00 : f32
    %216 = vector.broadcast %cst_44 : f32 to vector<8x256xf32>
    %217 = arith.subf %216, %207 : vector<8x256xf32>
    %cst_45 = arith.constant 1.000000e+02 : f32
    %218 = vector.broadcast %cst_45 : f32 to vector<8x256xf32>
    %219 = arith.mulf %218, %217 : vector<8x256xf32>
    %220 = arith.addf %215, %219 : vector<8x256xf32>
    %cst_46 = arith.constant 1.000000e+00 : f32
    %221 = vector.broadcast %cst_46 : f32 to vector<1x256xf32>
    %222 = arith.subf %221, %206 : vector<1x256xf32>
    %cst_47 = arith.constant 1.000000e+04 : f32
    %223 = vector.broadcast %cst_47 : f32 to vector<1x256xf32>
    %224 = arith.mulf %223, %222 : vector<1x256xf32>
    %225 = vector.broadcast %224 : vector<1x256xf32> to vector<8x256xf32>
    %226 = arith.addf %220, %225 : vector<8x256xf32>
    %c0_48 = arith.constant 0 : index
    %c0_49 = arith.constant 0 : index
    %c0_50 = arith.constant 0 : index
    %227 = vector.load %arg7[%c0_48, %c0_49, %c0_50] : memref<1x8x256xf32, #tpu.memory_space<vmem>>, vector<1x8x256xf32>
    %228 = vector.shape_cast %227 : vector<1x8x256xf32> to vector<8x256xf32>
    %229 = vector.shape_cast %226 : vector<8x256xf32> to vector<1x8x256xf32>
    tpu.vector_store %arg7[%c0_48, %c0_49, %c0_50], %229 {strides = array<i32>} : memref<1x8x256xf32, #tpu.memory_space<vmem>>, vector<1x8x256xf32>,
    %c0_51 = arith.constant 0 : index
    %c0_52 = arith.constant 0 : index
    %c0_53 = arith.constant 0 : index
    %230 = vector.load %arg8[%c0_51, %c0_52, %c0_53] : memref<1x8x256xf32, #tpu.memory_space<vmem>>, vector<1x8x256xf32>
    %231 = vector.shape_cast %230 : vector<1x8x256xf32> to vector<8x256xf32>
    %232 = vector.shape_cast %77 : vector<8x256xf32> to vector<1x8x256xf32>
    tpu.vector_store %arg8[%c0_51, %c0_52, %c0_53], %232 {strides = array<i32>} : memref<1x8x256xf32, #tpu.memory_space<vmem>>, vector<1x8x256xf32>,
    %c0_54 = arith.constant 0 : index
    %c0_55 = arith.constant 0 : index
    %c0_56 = arith.constant 0 : index
    %233 = vector.load %arg9[%c0_54, %c0_55, %c0_56] : memref<1x1x256xf32, #tpu.memory_space<vmem>>, vector<1x1x256xf32>
    %234 = vector.shape_cast %233 : vector<1x1x256xf32> to vector<1x256xf32>
    %235 = vector.shape_cast %206 : vector<1x256xf32> to vector<1x1x256xf32>
    tpu.vector_store %arg9[%c0_54, %c0_55, %c0_56], %235 {strides = array<i32>} : memref<1x1x256xf32, #tpu.memory_space<vmem>>, vector<1x1x256xf32>,
    return
  }
  func.func @transform_0(%arg0: i32, %arg1: i32) -> (i32, i32, i32) {
    %c0_i32 = arith.constant 0 : i32
    %c0_i32_0 = arith.constant 0 : i32
    return %arg0, %c0_i32, %arg1 : i32, i32, i32
  }
  func.func @transform_1(%arg0: i32, %arg1: i32) -> (i32, i32, i32) {
    %c0_i32 = arith.constant 0 : i32
    %c0_i32_0 = arith.constant 0 : i32
    return %arg0, %c0_i32, %arg1 : i32, i32, i32
  }
  func.func @transform_2(%arg0: i32, %arg1: i32) -> (i32, i32, i32) {
    %c0_i32 = arith.constant 0 : i32
    %c0_i32_0 = arith.constant 0 : i32
    %c0_i32_1 = arith.constant 0 : i32
    return %arg0, %c0_i32, %c0_i32_0 : i32, i32, i32
  }
  func.func @transform_3(%arg0: i32, %arg1: i32) -> (i32, i32, i32) {
    %c0_i32 = arith.constant 0 : i32
    %c0_i32_0 = arith.constant 0 : i32
    %c0_i32_1 = arith.constant 0 : i32
    return %arg0, %c0_i32, %c0_i32_0 : i32, i32, i32
  }
  func.func @transform_4(%arg0: i32, %arg1: i32) -> (i32, i32, i32) {
    %c0_i32 = arith.constant 0 : i32
    %c0_i32_0 = arith.constant 0 : i32
    %c0_i32_1 = arith.constant 0 : i32
    return %arg0, %c0_i32, %c0_i32_0 : i32, i32, i32
  }
  func.func @transform_5(%arg0: i32, %arg1: i32) -> (i32, i32, i32) {
    %c0_i32 = arith.constant 0 : i32
    %c0_i32_0 = arith.constant 0 : i32
    return %arg0, %c0_i32, %arg1 : i32, i32, i32
  }
  func.func @transform_6(%arg0: i32, %arg1: i32) -> (i32, i32, i32) {
    %c0_i32 = arith.constant 0 : i32
    %c0_i32_0 = arith.constant 0 : i32
    return %arg0, %c0_i32, %arg1 : i32, i32, i32
  }
  func.func @transform_7(%arg0: i32, %arg1: i32) -> (i32, i32, i32) {
    %c0_i32 = arith.constant 0 : i32
    %c0_i32_0 = arith.constant 0 : i32
    return %arg0, %c0_i32, %arg1 : i32, i32, i32
  }
}

</mosaic_0001>

<llo_original>
// kernel: matcher_cost_pallas.1
$region0: #{matcher_cost_pallas.1}
  #allocation0 [shape = 'u32[]', space=smem, size = 0x4, offset = 0x4, fixed_abs, tag = 'smem constant byte address 0x4 - core index']
  #allocation1 [shape = 'u32[144,128]{1,0:T(1,128)}', space=vmem, size = 0x12000, scoped, tag = 'internal scratch']
  %s0 = inlined_call_operand.hbm [shape: f32[2,16,256], index: 0, kind: input, shape index: {}]
  %s1 = inlined_call_operand.vmem [shape: f32[2,4,256], index: 1, kind: input, shape index: {}]
  %s2 = inlined_call_operand.hbm [shape: f32[2,8,16], index: 2, kind: input, shape index: {}]
  %s3 = inlined_call_operand.vmem [shape: f32[2,8,4], index: 3, kind: input, shape index: {}]
  %s4 = inlined_call_operand.vmem [shape: f32[2,1,4], index: 4, kind: input, shape index: {}]
  %s5 = inlined_call_operand.hbm [shape: f32[2,8,256], index: 5, kind: output, shape index: {0}]
  %s6 = inlined_call_operand.hbm [shape: f32[2,8,256], index: 6, kind: output, shape index: {1}]
  %s7 = inlined_call_operand.hbm [shape: f32[2,1,256], index: 7, kind: output, shape index: {2}]
  %8 = xla_tuple %s5, %s6, %s7
  %s9 = sld [smem:[#allocation0]]
  $region77: #{matcher_cost_pallas.1} parent=0
    _
  %s11 = ssub.s32 1, %s9
  %s12 = scalar_select 0, %s11, %s9
  $region1: #{matcher_cost_pallas.1} parent=0
    #allocation2 [shape = 'u8[32768]{0}', space=vmem, size = 0x8000, scoped, tag = 'input window, operand 0']
    #allocation3 [shape = 's32[2]{0}', space=sflag, size = 0x8, scoped, tag = 'scoped memory for matcher_cost_pallas.1']
    #allocation4 [shape = 's32[2]{0}', space=sflag, size = 0x8, scoped, tag = 'scoped memory for matcher_cost_pallas.1']
    #allocation5 [shape = 'u8[8192]{0}', space=vmem, size = 0x2000, scoped, tag = 'input window, operand 2']
    #allocation6 [shape = 's32[2]{0}', space=sflag, size = 0x8, scoped, tag = 'scoped memory for matcher_cost_pallas.1']
    #allocation7 [shape = 'u8[16384]{0}', space=vmem, size = 0x4000, scoped, tag = 'output window, operand 0']
    #allocation8 [shape = 'u8[16384]{0}', space=vmem, size = 0x4000, scoped, tag = 'output window, operand 1']
    #allocation9 [shape = 's32[2]{0}', space=sflag, size = 0x8, scoped, tag = 'scoped memory for matcher_cost_pallas.1']
    #allocation10 [shape = 'u8[2048]{0}', space=vmem, size = 0x800, scoped, tag = 'output window, operand 2']
    %13 = vsyncpa [#allocation3], 0
    %s14 = scalar_lea.sflag [#allocation3], 1
    %15 = vsyncpa %s14, 0
    %16 = vsyncpa [#allocation6], 0
    %s17 = scalar_lea.sflag [#allocation6], 1
    %18 = vsyncpa %s17, 0
    %19 = vsyncpa [#allocation4], 0
    %s20 = scalar_lea.sflag [#allocation4], 1
    %21 = vsyncpa %s20, 0
    %22 = vsyncpa [#allocation9], 0
    %s23 = scalar_lea.sflag [#allocation9], 1
    %24 = vsyncpa %s23, 0
    loop: start=0, step=1, limit=4
    $region2: #{matcher_cost_pallas.1} parent=1 // loop_pre_header
      _
    $region3: #{matcher_cost_pallas.1} parent=1 // loop_header
      %s26 = sphi 0, %s30
      %p27 = scmp.ge.s32.totalorder %s26, 4
      %s33 = sphi 0, %s45
      %s34 = sphi 0, %s41
      %s35 = sphi 0, %s33
      %s36 = sphi 0, %s34
      %s37 = sphi 0, %s35
      %s38 = sphi 0, %s36
      %s50 = sphi 0, %s52
      %s53 = sphi 0, %s50
      %s54 = sphi 0, %s53
      %s70 = sphi 0, %s54
      %s78 = sphi 0, %s80
      %s81 = sphi 0, %s78
      %s82 = sphi 0, %s81
      %s98 = sphi 0, %s82
      %s104 = sphi 0, %s106
      %s107 = sphi 0, %s104
      %s108 = sphi 0, %s107
      %s124 = sphi 0, %s108
      %s130 = sphi 0, %s132
      %s133 = sphi 0, %s130
      %s134 = sphi 0, %s133
      %s150 = sphi 0, %s134
      %s156 = sphi 0, %s158
      %s159 = sphi 0, %s156
      %s160 = sphi 0, %s159
      %s176 = sphi 0, %s160
      %s184 = sphi 0, %s186
      %s187 = sphi 0, %s184
      %s188 = sphi 0, %s187
      %s204 = sphi 0, %s188
      %s212 = sphi 0, %s214
      %s215 = sphi 0, %s212
      %s216 = sphi 0, %s215
      %s232 = sphi 0, %s216
      %s240 = sphi 0, %s242
      %s243 = sphi 0, %s240
      %s244 = sphi 0, %s243
      %s260 = sphi 0, %s244
    $region4: #{matcher_cost_pallas.1} parent=1 // loop_header_branch
      %29 = sbr.rel (%p27) target = $region8
    $region5: #{matcher_cost_pallas.1} parent=1 // loop_body
      %s31 = ssub.s32 %s26, 1
      %s32 = ssub.s32 %s26, 2
      %s39 = sadd.s32 1, %s34
      %p40 = scmp.ge.s32.totalorder %s39, 1
      %s41 = scalar_select %p40, 0, %s39
      %s42 = sadd.s32 1, %s33
      %s43 = scalar_select %p40, %s42, %s33
      %p44 = scmp.ge.s32.totalorder %s43, 2
      %s45 = scalar_select %p44, 0, %s43
      %s46 = ssub.s32 %s33, %s45
      %s47 = ssub.s32 %s34, %s41
      %s48 = sor.u32 %s46, %s47
      %p49 = scmp.eq.s32.totalorder %s48, 0
      %s51 = sadd.s32 %s50, 1
      %s52 = scalar_select %p49, %s50, %s51
      %p55 = pneg %p49
      %p56 = scmp.eq.s32.totalorder %s26, 1
      %p57 = por %p55, %p56
      %p58 = scmp.ne.s32.totalorder %s50, %s53
      %p59 = scmp.eq.s32.totalorder %s26, 0
      %p60 = por %p58, %p59
      %p61 = scmp.ne.s32.totalorder %s50, %s53
      %p62 = scmp.eq.s32.totalorder %s31, 1
      %p63 = por %p61, %p62
      %p64 = scmp.ne.s32.totalorder %s53, %s54
      %p65 = scmp.eq.s32.totalorder %s31, 0
      %p66 = por %p64, %p65
      %p67 = scmp.ne.s32.totalorder %s53, %s54
      %p68 = scmp.eq.s32.totalorder %s32, 1
      %p69 = por %p67, %p68
      %p71 = scmp.ne.s32.totalorder %s54, %s70
      %p72 = scmp.eq.s32.totalorder %s32, 0
      %p73 = por %p71, %p72
      %s74 = ssub.s32 %s33, %s45
      %s75 = ssub.s32 %s34, %s41
      %s76 = sor.u32 %s74, %s75
      %p77 = scmp.eq.s32.totalorder %s76, 0
      %s79 = sadd.s32 %s78, 1
      %s80 = scalar_select %p77, %s78, %s79
      %p83 = pneg %p77
      %p84 = scmp.eq.s32.totalorder %s26, 1
      %p85 = por %p83, %p84
      %p86 = scmp.ne.s32.totalorder %s78, %s81
      %p87 = scmp.eq.s32.totalorder %s26, 0
      %p88 = por %p86, %p87
      %p89 = scmp.ne.s32.totalorder %s78, %s81
      %p90 = scmp.eq.s32.totalorder %s31, 1
      %p91 = por %p89, %p90
      %p92 = scmp.ne.s32.totalorder %s81, %s82
      %p93 = scmp.eq.s32.totalorder %s31, 0
      %p94 = por %p92, %p93
      %p95 = scmp.ne.s32.totalorder %s81, %s82
      %p96 = scmp.eq.s32.totalorder %s32, 1
      %p97 = por %p95, %p96
      %p99 = scmp.ne.s32.totalorder %s82, %s98
      %p100 = scmp.eq.s32.totalorder %s32, 0
      %p101 = por %p99, %p100
      %s102 = ssub.s32 %s33, %s45
      %p103 = scmp.eq.s32.totalorder %s102, 0
      %s105 = sadd.s32 %s104, 1
      %s106 = scalar_select %p103, %s104, %s105
      %p109 = pneg %p103
      %p110 = scmp.eq.s32.totalorder %s26, 1
      %p111 = por %p109, %p110
      %p112 = scmp.ne.s32.totalorder %s104, %s107
      %p113 = scmp.eq.s32.totalorder %s26, 0
      %p114 = por %p112, %p113
      %p115 = scmp.ne.s32.totalorder %s104, %s107
      %p116 = scmp.eq.s32.totalorder %s31, 1
      %p117 = por %p115, %p116
      %p118 = scmp.ne.s32.totalorder %s107, %s108
      %p119 = scmp.eq.s32.totalorder %s31, 0
      %p120 = por %p118, %p119
      %p121 = scmp.ne.s32.totalorder %s107, %s108
      %p122 = scmp.eq.s32.totalorder %s32, 1
      %p123 = por %p121, %p122
      %p125 = scmp.ne.s32.totalorder %s108, %s124
      %p126 = scmp.eq.s32.totalorder %s32, 0
      %p127 = por %p125, %p126
      %s128 = ssub.s32 %s33, %s45
      %p129 = scmp.eq.s32.totalorder %s128, 0
      %s131 = sadd.s32 %s130, 1
      %s132 = scalar_select %p129, %s130, %s131
      %p135 = pneg %p129
      %p136 = scmp.eq.s32.totalorder %s26, 1
      %p137 = por %p135, %p136
      %p138 = scmp.ne.s32.totalorder %s130, %s133
      %p139 = scmp.eq.s32.totalorder %s26, 0
      %p140 = por %p138, %p139
      %p141 = scmp.ne.s32.totalorder %s130, %s133
      %p142 = scmp.eq.s32.totalorder %s31, 1
      %p143 = por %p141, %p142
      %p144 = scmp.ne.s32.totalorder %s133, %s134
      %p145 = scmp.eq.s32.totalorder %s31, 0
      %p146 = por %p144, %p145
      %p147 = scmp.ne.s32.totalorder %s133, %s134
      %p148 = scmp.eq.s32.totalorder %s32, 1
      %p149 = por %p147, %p148
      %p151 = scmp.ne.s32.totalorder %s134, %s150
      %p152 = scmp.eq.s32.totalorder %s32, 0
      %p153 = por %p151, %p152
      %s154 = ssub.s32 %s33, %s45
      %p155 = scmp.eq.s32.totalorder %s154, 0
      %s157 = sadd.s32 %s156, 1
      %s158 = scalar_select %p155, %s156, %s157
      %p161 = pneg %p155
      %p162 = scmp.eq.s32.totalorder %s26, 1
      %p163 = por %p161, %p162
      %p164 = scmp.ne.s32.totalorder %s156, %s159
      %p165 = scmp.eq.s32.totalorder %s26, 0
      %p166 = por %p164, %p165
      %p167 = scmp.ne.s32.totalorder %s156, %s159
      %p168 = scmp.eq.s32.totalorder %s31, 1
      %p169 = por %p167, %p168
      %p170 = scmp.ne.s32.totalorder %s159, %s160
      %p171 = scmp.eq.s32.totalorder %s31, 0
      %p172 = por %p170, %p171
      %p173 = scmp.ne.s32.totalorder %s159, %s160
      %p174 = scmp.eq.s32.totalorder %s32, 1
      %p175 = por %p173, %p174
      %p177 = scmp.ne.s32.totalorder %s160, %s176
      %p178 = scmp.eq.s32.totalorder %s32, 0
      %p179 = por %p177, %p178
      %s180 = ssub.s32 %s33, %s45
      %s181 = ssub.s32 %s34, %s41
      %s182 = sor.u32 %s180, %s181
      %p183 = scmp.eq.s32.totalorder %s182, 0
      %s185 = sadd.s32 %s184, 1
      %s186 = scalar_select %p183, %s184, %s185
      %p189 = pneg %p183
      %p190 = scmp.eq.s32.totalorder %s26, 1
      %p191 = por %p189, %p190
      %p192 = scmp.ne.s32.totalorder %s184, %s187
      %p193 = scmp.eq.s32.totalorder %s26, 0
      %p194 = por %p192, %p193
      %p195 = scmp.ne.s32.totalorder %s184, %s187
      %p196 = scmp.eq.s32.totalorder %s31, 1
      %p197 = por %p195, %p196
      %p198 = scmp.ne.s32.totalorder %s187, %s188
      %p199 = scmp.eq.s32.totalorder %s31, 0
      %p200 = por %p198, %p199
      %p201 = scmp.ne.s32.totalorder %s187, %s188
      %p202 = scmp.eq.s32.totalorder %s32, 1
      %p203 = por %p201, %p202
      %p205 = scmp.ne.s32.totalorder %s188, %s204
      %p206 = scmp.eq.s32.totalorder %s32, 0
      %p207 = por %p205, %p206
      %s208 = ssub.s32 %s33, %s45
      %s209 = ssub.s32 %s34, %s41
      %s210 = sor.u32 %s208, %s209
      %p211 = scmp.eq.s32.totalorder %s210, 0
      %s213 = sadd.s32 %s212, 1
      %s214 = scalar_select %p211, %s212, %s213
      %p217 = pneg %p211
      %p218 = scmp.eq.s32.totalorder %s26, 1
      %p219 = por %p217, %p218
      %p220 = scmp.ne.s32.totalorder %s212, %s215
      %p221 = scmp.eq.s32.totalorder %s26, 0
      %p222 = por %p220, %p221
      %p223 = scmp.ne.s32.totalorder %s212, %s215
      %p224 = scmp.eq.s32.totalorder %s31, 1
      %p225 = por %p223, %p224
      %p226 = scmp.ne.s32.totalorder %s215, %s216
      %p227 = scmp.eq.s32.totalorder %s31, 0
      %p228 = por %p226, %p227
      %p229 = scmp.ne.s32.totalorder %s215, %s216
      %p230 = scmp.eq.s32.totalorder %s32, 1
      %p231 = por %p229, %p230
      %p233 = scmp.ne.s32.totalorder %s216, %s232
      %p234 = scmp.eq.s32.totalorder %s32, 0
      %p235 = por %p233, %p234
      %s236 = ssub.s32 %s33, %s45
      %s237 = ssub.s32 %s34, %s41
      %s238 = sor.u32 %s236, %s237
      %p239 = scmp.eq.s32.totalorder %s238, 0
      %s241 = sadd.s32 %s240, 1
      %s242 = scalar_select %p239, %s240, %s241
      %p245 = pneg %p239
      %p246 = scmp.eq.s32.totalorder %s26, 1
      %p247 = por %p245, %p246
      %p248 = scmp.ne.s32.totalorder %s240, %s243
      %p249 = scmp.eq.s32.totalorder %s26, 0
      %p250 = por %p248, %p249
      %p251 = scmp.ne.s32.totalorder %s240, %s243
      %p252 = scmp.eq.s32.totalorder %s31, 1
      %p253 = por %p251, %p252
      %p254 = scmp.ne.s32.totalorder %s243, %s244
      %p255 = scmp.eq.s32.totalorder %s31, 0
      %p256 = por %p254, %p255
      %p257 = scmp.ne.s32.totalorder %s243, %s244
      %p258 = scmp.eq.s32.totalorder %s32, 1
      %p259 = por %p257, %p258
      %p261 = scmp.ne.s32.totalorder %s244, %s260
      %p262 = scmp.eq.s32.totalorder %s32, 0
      %p263 = por %p261, %p262
      %p264 = scmp.le.s32.totalorder 1, %s26
      %p265 = scmp.lt.s32.totalorder %s26, 3
      %p266 = pnand %p264, %p265
      %p267 = pneg %p266
      // Predicated region
      $region9: #{matcher_cost_pallas.1} parent=5 // pred_check
        _
      $region10: #{matcher_cost_pallas.1} parent=5 // pred_check_branch
        %269 = sbr.rel (%p266) target = $region12
      $region11: #{matcher_cost_pallas.1} parent=5 // pred_region
        %s270 = ssub.s32 %s26, 1
      $region12: #{matcher_cost_pallas.1} parent=5 // pred_fallthru
        _
      %p271 = scmp.lt.s32.totalorder %s26, 2
      // Predicated region
      $region13: #{matcher_cost_pallas.1} parent=5 // pred_check
        %p272 = pneg %p271
      $region14: #{matcher_cost_pallas.1} parent=5 // pred_check_branch
        %274 = sbr.rel (%p272) target = $region16
      $region15: #{matcher_cost_pallas.1} parent=5 // pred_region
        // Predicated region
        $region17: #{matcher_cost_pallas.1} parent=15 // pred_check
          %p275 = pneg %p60
        $region18: #{matcher_cost_pallas.1} parent=15 // pred_check_branch
          %277 = sbr.rel (%p275) target = $region20
        $region19: #{matcher_cost_pallas.1} parent=15 // pred_region
          %s278 = sand.u32 %s50, 1
          %s279 = scalar_lea.sflag [#allocation3], %s278
          %s280 = sand.u32 %s50, 1
          %s281 = smul.addr %s280, 32
          %s282 = scalar_lea.vmem [#allocation2], %s281
          %s283 = smul.u32 2, %s34
          %s285 = ssub.s32 512, 512
          %286 = vsyncadd %s279, %s285
          %s287 = smul.addr %s33, 4
          %s288 = sadd.s32 %s283, %s287
          %s289 = smul.addr %s288, 128
          %s290 = scalar_lea.hbm %s0, %s289
          %s291 = sshll.u32 %s282, 4
          %s292 = int_to_ptr.vmem [resolvable:$true] %s291
          %297 = dma.hbm_to_vmem [thread:$0]  %s290, 512, %s292, %s279, 256, 256, 16
        $region20: #{matcher_cost_pallas.1} parent=15 // pred_fallthru
          _
        // Predicated region
        $region21: #{matcher_cost_pallas.1} parent=15 // pred_check
          %p298 = pneg %p88
        $region22: #{matcher_cost_pallas.1} parent=15 // pred_check_branch
          %300 = sbr.rel (%p298) target = $region24
        $region23: #{matcher_cost_pallas.1} parent=15 // pred_region
          %s301 = smul.u32 2, %s34
          %p302 = scmp.lt.s32.totalorder %s33, 1
          %s303 = scalar_select %p302, %s33, 1
          %p304 = scmp.lt.s32.totalorder %s301, 1
          %s305 = scalar_select %p304, %s301, 1
          %s306 = smul.addr %s303, 2
          %s307 = sadd.s32 %s305, %s306
          %s308 = smul.addr %s307, 4
          %s309 = scalar_lea.vmem %s1, %s308
          %s310 = smul.u32 2, %s34
        $region24: #{matcher_cost_pallas.1} parent=15 // pred_fallthru
          _
        // Predicated region
        $region25: #{matcher_cost_pallas.1} parent=15 // pred_check
          %p311 = pneg %p114
        $region26: #{matcher_cost_pallas.1} parent=15 // pred_check_branch
          %313 = sbr.rel (%p311) target = $region28
        $region27: #{matcher_cost_pallas.1} parent=15 // pred_region
          %s314 = sand.u32 %s104, 1
          %s315 = scalar_lea.sflag [#allocation6], %s314
          %s316 = sand.u32 %s104, 1
          %s317 = smul.addr %s316, 8
          %s318 = scalar_lea.vmem [#allocation5], %s317
          %s320 = ssub.s32 128, 128
          %321 = vsyncadd %s315, %s320
          %s322 = smul.addr %s33, 128
          %s323 = scalar_lea.hbm %s2, %s322
          %s325 = sshll.u32 %s318, 4
          %s326 = int_to_ptr.vmem [resolvable:$true] %s325
          %328 = dma.hbm_to_vmem [thread:$0]  %s323, 128, %s326, %s315
        $region28: #{matcher_cost_pallas.1} parent=15 // pred_fallthru
          _
        // Predicated region
        $region29: #{matcher_cost_pallas.1} parent=15 // pred_check
          %p329 = pneg %p140
        $region30: #{matcher_cost_pallas.1} parent=15 // pred_check_branch
          %331 = sbr.rel (%p329) target = $region32
        $region31: #{matcher_cost_pallas.1} parent=15 // pred_region
          %p332 = scmp.lt.s32.totalorder %s33, 1
          %s333 = scalar_select %p332, %s33, 1
          %s334 = smul.addr %s333, 8
          %s335 = scalar_lea.vmem %s3, %s334
        $region32: #{matcher_cost_pallas.1} parent=15 // pred_fallthru
          _
        // Predicated region
        $region33: #{matcher_cost_pallas.1} parent=15 // pred_check
          %p336 = pneg %p166
        $region34: #{matcher_cost_pallas.1} parent=15 // pred_check_branch
          %338 = sbr.rel (%p336) target = $region36
        $region35: #{matcher_cost_pallas.1} parent=15 // pred_region
          %p339 = scmp.lt.s32.totalorder %s33, 1
          %s340 = scalar_select %p339, %s33, 1
          %s341 = scalar_lea.vmem %s4, %s340
        $region36: #{matcher_cost_pallas.1} parent=15 // pred_fallthru
          _
      $region16: #{matcher_cost_pallas.1} parent=5 // pred_fallthru
        _
      %p342 = scmp.le.s32.totalorder 1, %s26
      %p343 = scmp.lt.s32.totalorder %s26, 3
      %p344 = pnand %p342, %p343
      %p345 = pneg %p344
      // Predicated region
      $region37: #{matcher_cost_pallas.1} parent=5 // pred_check
        _
      $region38: #{matcher_cost_pallas.1} parent=5 // pred_check_branch
        %347 = sbr.rel (%p344) target = $region40
      $region39: #{matcher_cost_pallas.1} parent=5 // pred_region
        %s348 = ssub.s32 %s26, 1
        %s349 = sand.u32 %s53, 1
        %s350 = scalar_lea.sflag [#allocation3], %s349
        %s351 = sand.u32 %s53, 1
        %s352 = smul.addr %s351, 32
        %s353 = scalar_lea.vmem [#allocation2], %s352
        // Predicated region
        $region41: #{matcher_cost_pallas.1} parent=39 // pred_check
          %p354 = pneg %p66
        $region42: #{matcher_cost_pallas.1} parent=39 // pred_check_branch
          %356 = sbr.rel (%p354) target = $region44
        $region43: #{matcher_cost_pallas.1} parent=39 // pred_region
          %357 = dma.done %s350, 512
        $region44: #{matcher_cost_pallas.1} parent=39 // pred_fallthru
          _
        %s358 = sand.u32 %s107, 1
        %s359 = scalar_lea.sflag [#allocation6], %s358
        %s360 = sand.u32 %s107, 1
        %s361 = smul.addr %s360, 8
        %s362 = scalar_lea.vmem [#allocation5], %s361
        // Predicated region
        $region45: #{matcher_cost_pallas.1} parent=39 // pred_check
          %p363 = pneg %p120
        $region46: #{matcher_cost_pallas.1} parent=39 // pred_check_branch
          %365 = sbr.rel (%p363) target = $region48
        $region47: #{matcher_cost_pallas.1} parent=39 // pred_region
          %366 = dma.done %s359, 128
        $region48: #{matcher_cost_pallas.1} parent=39 // pred_fallthru
          _
        %s367 = sand.u32 %s53, 1
        %s368 = scalar_lea.sflag [#allocation3], %s367
        %s369 = sand.u32 %s53, 1
        %s370 = smul.addr %s369, 32
        %s371 = scalar_lea.vmem [#allocation2], %s370
        %p372 = pneg %p66
        %p373 = pneg %p63
        %s374 = smul.u32 2, %s36
        %p375 = scmp.lt.s32.totalorder %s35, 1
        %s376 = scalar_select %p375, %s35, 1
        %p377 = scmp.lt.s32.totalorder %s374, 1
        %s378 = scalar_select %p377, %s374, 1
        %s379 = smul.addr %s376, 2
        %s380 = sadd.s32 %s378, %s379
        %s381 = smul.addr %s380, 4
        %s382 = scalar_lea.vmem %s1, %s381
        %p383 = pneg %p94
        %p384 = pneg %p91
        %s385 = sand.u32 %s107, 1
        %s386 = scalar_lea.sflag [#allocation6], %s385
        %s387 = sand.u32 %s107, 1
        %s388 = smul.addr %s387, 8
        %s389 = scalar_lea.vmem [#allocation5], %s388
        %p390 = pneg %p120
        %p391 = pneg %p117
        %p392 = scmp.lt.s32.totalorder %s35, 1
        %s393 = scalar_select %p392, %s35, 1
        %s394 = smul.addr %s393, 8
        %s395 = scalar_lea.vmem %s3, %s394
        %p396 = pneg %p146
        %p397 = pneg %p143
        %p398 = scmp.lt.s32.totalorder %s35, 1
        %s399 = scalar_select %p398, %s35, 1
        %s400 = scalar_lea.vmem %s4, %s399
        %p401 = pneg %p172
        %p402 = pneg %p169
        %p403 = pneg %p200
        %p404 = pneg %p197
        %s405 = sand.u32 %s187, 1
        %s406 = scalar_lea.sflag [#allocation4], %s405
        %s407 = sand.u32 %s187, 1
        %s408 = smul.addr %s407, 16
        %s409 = scalar_lea.vmem [#allocation7], %s408
        %p410 = pneg %p228
        %p411 = pneg %p225
        %s412 = sand.u32 %s31, 1
        %s413 = scalar_lea.sflag [#allocation9], %s412
        %s414 = sand.u32 %s215, 1
        %s415 = smul.addr %s414, 16
        %s416 = scalar_lea.vmem [#allocation8], %s415
        %p417 = pneg %p256
        %p418 = pneg %p253
        %s419 = sand.u32 %s31, 1
        %s420 = scalar_lea.sflag [#allocation9], %s419
        %s421 = sand.u32 %s243, 1
        %s422 = smul.addr %s421, 2
        %s423 = scalar_lea.vmem [#allocation10], %s422
        %s424 = smul.u32 2, %s36
        %s425 = smul.u32 2, %s36
        %p426 = scmp.lt.s32.totalorder %s35, 1
        %s427 = scalar_select %p426, %s35, 1
        %p428 = scmp.lt.s32.totalorder %s425, 1
        %s429 = scalar_select %p428, %s425, 1
        %s430 = smul.addr %s427, 2
        %s431 = sadd.s32 %s429, %s430
        %s432 = smul.addr %s431, 4
        %s433 = scalar_lea.vmem %s1, %s432
        %s434 = smul.u32 2, %s36
        %p435 = scmp.lt.s32.totalorder %s35, 1
        %s436 = scalar_select %p435, %s35, 1
        %s437 = smul.addr %s436, 8
        %s438 = scalar_lea.vmem %s3, %s437
        %p439 = scmp.lt.s32.totalorder %s35, 1
        %s440 = scalar_select %p439, %s35, 1
        %s441 = scalar_lea.vmem %s4, %s440
        %s442 = smul.u32 2, %s36
        %s443 = smul.u32 2, %s36
        %s444 = smul.u32 2, %s36
        %v445 = vld [vmem:[%s353] sm:$0xff]
        %v446 = vld [vmem:[%s353 + $0x8] sm:$0xff]
        %v447 = vld [vmem:[%s353 + $0x10] sm:$0xff]
        %v448 = vld [vmem:[%s353 + $0x18] sm:$0xff]
        %v449 = vld [vmem:[%s433] sm:$0xff]
        %v450 = vld [vmem:[%s362] sm:$0xff]
        %v451 = vld [vmem:[%s438] sm:$0xff]
        %v452 = vld [vmem:[%s441] sm:$0x1]
        %vm453 = vcmask 130048
        %v455 = vsel %vm453, %v450, 0
        %457 = vmatprep.subr.mxu0 %v446
        %458 = vmatpush1.msra.mxu0 %v445
        %459 = vmatprep.subr.mxu0 %v448
        %460 = vmatpush1.msra.mxu0 %v447
        %461 = vmatprep.subr.mxu0 0.0
        %462 = vmatpush1.msra.mxu0 0.0
        %463 = vmatprep.subr.mxu0 0.0
        %464 = vmatpush1.msra.mxu0 0.0
        %465 = vmatprep.subr.mxu0 0.0
        %466 = vmatpush1.msra.mxu0 0.0
        %467 = vmatprep.subr.mxu0 0.0
        %468 = vmatpush1.msra.mxu0 0.0
        %469 = vmatprep.subr.mxu0 0.0
        %470 = vmatpush1.msra.mxu0 0.0
        %471 = vmatprep.subr.mxu0 0.0
        %472 = vmatpush1.msra.mxu0 0.0
        %473 = vmatprep.subr.mxu0 0.0
        %474 = vmatpush1.msra.mxu0 0.0
        %475 = vmatprep.subr.mxu0 0.0
        %476 = vmatpush1.msra.mxu0 0.0
        %477 = vmatprep.subr.mxu0 0.0
        %478 = vmatpush1.msra.mxu0 0.0
        %479 = vmatprep.subr.mxu0 0.0
        %480 = vmatpush1.msra.mxu0 0.0
        %481 = vmatprep.subr.mxu0 0.0
        %482 = vmatpush1.msra.mxu0 0.0
        %483 = vmatprep.subr.mxu0 0.0
        %484 = vmatpush1.msra.mxu0 0.0
        %485 = vmatprep.subr.mxu0 0.0
        %486 = vmatpush1.msra.mxu0 0.0
        %487 = vmatprep.subr.mxu0 0.0
        %488 = vmatpush1.msra.mxu0 0.0
        %489 = vmatprep.subr.mxu0 0.0
        %490 = vmatpush1.msra.mxu0 0.0
        %491 = vmatprep.subr.mxu0 0.0
        %492 = vmatpush1.msra.mxu0 0.0
        %493 = vmatprep.subr.mxu0 0.0
        %494 = vmatpush1.msra.mxu0 0.0
        %495 = vmatprep.subr.mxu0 0.0
        %496 = vmatpush1.msra.mxu0 0.0
        %497 = vmatprep.subr.mxu0 0.0
        %498 = vmatpush1.msra.mxu0 0.0
        %499 = vmatprep.subr.mxu0 0.0
        %500 = vmatpush1.msra.mxu0 0.0
        %501 = vmatprep.subr.mxu0 0.0
        %502 = vmatpush1.msra.mxu0 0.0
        %503 = vmatprep.subr.mxu0 0.0
        %504 = vmatpush1.msra.mxu0 0.0
        %505 = vmatprep.subr.mxu0 0.0
        %506 = vmatpush1.msra.mxu0 0.0
        %507 = vmatprep.subr.mxu0 0.0
        %508 = vmatpush1.msra.mxu0 0.0
        %509 = vmatprep.subr.mxu0 0.0
        %510 = vmatpush1.msra.mxu0 0.0
        %511 = vmatprep.subr.mxu0 0.0
        %512 = vmatpush1.msra.mxu0 0.0
        %513 = vmatprep.subr.mxu0 0.0
        %514 = vmatpush1.msra.mxu0 0.0
        %515 = vmatprep.subr.mxu0 0.0
        %516 = vmatpush1.msra.mxu0 0.0
        %517 = vmatprep.subr.mxu0 0.0
        %518 = vmatpush1.msra.mxu0 0.0
        %519 = vmatprep.subr.mxu0 0.0
        %520 = vmatpush1.msra.mxu0 0.0
        %521 = vmatprep.mubr.f32.mxu0 0.0
        %522 = vmatmul.mubr.f32.gmra.mrb[0].mxu0 %v455
        %v523 = vpop.f32.mrb[0].mxu0
        %v524 = vadd.f32 0.0, %v523
        %v525 = vpop.f32.mrb[0].mxu0
        %v526 = vadd.f32 0.0, %v525
        %527 = vdwg.mxu0
        %v528 = vxor.u32 %v524, 2147483648
        %v529 = vxor.u32 %v526, 2147483648
        %v530 = vmul.f32 %v528, 1.442695
        %v531 = vpow.pop %v530
        %v532 = vmul.f32 %v529, 1.442695
        %v533 = vpow.pop %v532
        %v534 = vadd.f32 %v531, 1.0
        %v535 = vadd.f32 %v533, 1.0
        %v536 = vrcp.pop %v534
        %v537 = vmul.f32 1.0, %v536
        %v538 = vrcp.pop %v535
        %v539 = vmul.f32 1.0, %v538
        %v540 = vsub.f32 1.0, %v537
        %v541 = vsub.f32 1.0, %v539
        %v542 = vmul.f32 %v537, %v537
        %v543 = vmul.f32 %v539, %v539
        %v544 = vmul.f32 %v542, 0.75
        %v545 = vmul.f32 %v543, 0.75
        %v546 = vadd.f32 %v540, 1e-08
        %v547 = vadd.f32 %v541, 1e-08
        %v548 = vlog2.pop %v546
        %v549 = vmul.f32 %v548, 0.6931472
        %v550 = vlog2.pop %v547
        %v551 = vmul.f32 %v550, 0.6931472
        %v552 = vsub.f32 0.0, %v549
        %v553 = vsub.f32 0.0, %v551
        %v554 = vmul.f32 %v544, %v552
        %v555 = vmul.f32 %v545, %v553
        %v556 = vmul.f32 %v540, %v540
        %v557 = vmul.f32 %v541, %v541
        %v558 = vmul.f32 %v556, 0.25
        %v559 = vmul.f32 %v557, 0.25
        %v560 = vadd.f32 %v537, 1e-08
        %v561 = vadd.f32 %v539, 1e-08
        %v562 = vlog2.pop %v560
        %v563 = vmul.f32 %v562, 0.6931472
        %v564 = vlog2.pop %v561
        %v565 = vmul.f32 %v564, 0.6931472
        %v566 = vsub.f32 0.0, %v563
        %v567 = vsub.f32 0.0, %v565
        %v568 = vmul.f32 %v558, %v566
        %v569 = vmul.f32 %v559, %v567
        %v570 = vsub.f32 %v568, %v554
        %v571 = vsub.f32 %v569, %v555
        %v573 = vrot.slane %v449, 6
        %v575 = vsub.f32 %v449, %v573
        %v577 = vrot.slane %v575, 5
        %v578 = vrot.slane %v577, 4
        %v580 = vmul.f32 %v575, %v578
        %582 = vrot.lane.b32.xlu0 %v451, 2
        %v583 = vpop.permute.xlu0 %582
        %v585 = vsub.f32 %v451, %v583
        %587 = vrot.lane.b32.xlu0 %v585, 127
        %v588 = vpop.permute.xlu0 %587
        %v590 = vmul.f32 %v585, %v588
        %v591 = vlaneseq
        %v592 = vshrl.u32 %v591, 7
        %v593 = vsub.s32 0, %v592
        %v594 = vrot.slane %v449, %v593
        %v595 = vlaneseq
        %v596 = vshrl.u32 %v595, 7
        %v597 = vsub.s32 4, %v596
        %v598 = vrot.slane %v449, %v597
        %v601 = vlaneseq
        %v602 = vshrl.u32 %v601, 7
        %v603 = vsub.s32 0, %v602
        %v604 = vrot.slane %v594, %v603
        %v605 = vlaneseq
        %v606 = vshrl.u32 %v605, 7
        %v607 = vsub.s32 0, %v606
        %v608 = vrot.slane %v598, %v607
        %609 = vset.pattern.permute.xlu0 0
        %610 = vperm.xlu0 %609, %v451
        %v611 = vpop.permute.xlu0 %610
        %v613 = vmax.f32 %v604, %v611
        %v614 = vmax.f32 %v608, %v611
        %v615 = vlaneseq
        %v616 = vshrl.u32 %v615, 7
        %v617 = vsub.s32 1, %v616
        %v618 = vrot.slane %v449, %v617
        %v619 = vlaneseq
        %v620 = vshrl.u32 %v619, 7
        %v621 = vsub.s32 5, %v620
        %v622 = vrot.slane %v449, %v621
        %v625 = vlaneseq
        %v626 = vshrl.u32 %v625, 7
        %v627 = vsub.s32 1, %v626
        %v628 = vrot.slane %v618, %v627
        %v629 = vlaneseq
        %v630 = vshrl.u32 %v629, 7
        %v631 = vsub.s32 1, %v630
        %v632 = vrot.slane %v622, %v631
        %633 = vset.pattern.permute.xlu0 1
        %634 = vperm.xlu0 %633, %v451
        %v635 = vpop.permute.xlu0 %634
        %v637 = vmax.f32 %v628, %v635
        %v638 = vmax.f32 %v632, %v635
        %v639 = vlaneseq
        %v640 = vshrl.u32 %v639, 7
        %v641 = vsub.s32 2, %v640
        %v642 = vrot.slane %v449, %v641
        %v643 = vlaneseq
        %v644 = vshrl.u32 %v643, 7
        %v645 = vsub.s32 6, %v644
        %v646 = vrot.slane %v449, %v645
        %v649 = vlaneseq
        %v650 = vshrl.u32 %v649, 7
        %v651 = vsub.s32 2, %v650
        %v652 = vrot.slane %v642, %v651
        %v653 = vlaneseq
        %v654 = vshrl.u32 %v653, 7
        %v655 = vsub.s32 2, %v654
        %v656 = vrot.slane %v646, %v655
        %657 = vset.pattern.permute.xlu0 2
        %658 = vperm.xlu0 %657, %v451
        %v659 = vpop.permute.xlu0 %658
        %v661 = vmin.f32 %v652, %v659
        %v662 = vmin.f32 %v656, %v659
        %v663 = vlaneseq
        %v664 = vshrl.u32 %v663, 7
        %v665 = vsub.s32 3, %v664
        %v666 = vrot.slane %v449, %v665
        %v667 = vlaneseq
        %v668 = vshrl.u32 %v667, 7
        %v669 = vsub.s32 7, %v668
        %v670 = vrot.slane %v449, %v669
        %v673 = vlaneseq
        %v674 = vshrl.u32 %v673, 7
        %v675 = vsub.s32 3, %v674
        %v676 = vrot.slane %v666, %v675
        %v677 = vlaneseq
        %v678 = vshrl.u32 %v677, 7
        %v679 = vsub.s32 3, %v678
        %v680 = vrot.slane %v670, %v679
        %681 = vset.pattern.permute.xlu0 3
        %682 = vperm.xlu0 %681, %v451
        %v683 = vpop.permute.xlu0 %682
        %v685 = vmin.f32 %v676, %v683
        %v686 = vmin.f32 %v680, %v683
        %v687 = vsub.f32 %v661, %v613
        %v688 = vsub.f32 %v662, %v614
        %v689 = vmax.f32 %v687, 0.0
        %v690 = vmax.f32 %v688, 0.0
        %v691 = vsub.f32 %v685, %v637
        %v692 = vsub.f32 %v686, %v638
        %v693 = vmax.f32 %v691, 0.0
        %v694 = vmax.f32 %v692, 0.0
        %v695 = vmul.f32 %v689, %v693
        %v696 = vmul.f32 %v690, %v694
        %v698 = vlaneseq
        %v699 = vshrl.u32 %v698, 7
        %v700 = vsub.s32 2, %v699
        %v701 = vrot.slane %v580, %v700
        %v702 = vlaneseq
        %v703 = vshrl.u32 %v702, 7
        %v704 = vsub.s32 6, %v703
        %v705 = vrot.slane %v580, %v704
        %v708 = vlaneseq
        %v709 = vshrl.u32 %v708, 7
        %v710 = vsub.s32 2, %v709
        %v711 = vrot.slane %v701, %v710
        %v712 = vlaneseq
        %v713 = vshrl.u32 %v712, 7
        %v714 = vsub.s32 2, %v713
        %v715 = vrot.slane %v705, %v714
        %717 = vset.pattern.permute.xlu0 2
        %718 = vperm.xlu0 %717, %v590
        %v719 = vpop.permute.xlu0 %718
        %v721 = vadd.f32 %v711, %v719
        %v722 = vadd.f32 %v715, %v719
        %v723 = vsub.f32 %v721, %v695
        %v724 = vsub.f32 %v722, %v696
        %v725 = vadd.f32 %v723, 1e-09
        %v726 = vadd.f32 %v724, 1e-09
        %v727 = vrcp.pop %v725
        %v728 = vrcp.pop %v726
        %v729 = vmul.f32 %v695, %v727
        %v730 = vmul.f32 %v696, %v728
        %v731 = vmin.f32 %v604, %v611
        %v732 = vmin.f32 %v608, %v611
        %v733 = vmin.f32 %v628, %v635
        %v734 = vmin.f32 %v632, %v635
        %v735 = vmax.f32 %v652, %v659
        %v736 = vmax.f32 %v656, %v659
        %v737 = vmax.f32 %v676, %v683
        %v738 = vmax.f32 %v680, %v683
        %v739 = vsub.f32 %v735, %v731
        %v740 = vsub.f32 %v736, %v732
        %v741 = vmax.f32 %v739, 0.0
        %v742 = vmax.f32 %v740, 0.0
        %v743 = vsub.f32 %v737, %v733
        %v744 = vsub.f32 %v738, %v734
        %v745 = vmax.f32 %v743, 0.0
        %v746 = vmax.f32 %v744, 0.0
        %v747 = vmul.f32 %v741, %v745
        %v748 = vmul.f32 %v742, %v746
        %v749 = vsub.f32 %v747, %v723
        %v750 = vsub.f32 %v748, %v724
        %v751 = vadd.f32 %v747, 1e-09
        %v752 = vadd.f32 %v748, 1e-09
        %v753 = vrcp.pop %v751
        %v754 = vrcp.pop %v752
        %v755 = vmul.f32 %v749, %v753
        %v756 = vmul.f32 %v750, %v754
        %v757 = vsub.f32 %v729, %v755
        %v758 = vsub.f32 %v730, %v756
        %v759 = vsub.f32 0.0, %v757
        %v760 = vsub.f32 0.0, %v758
        %v761 = vsub.f32 %v604, %v611
        %v762 = vsub.f32 %v608, %v611
        %v763 = vand.u32 2147483647, %v761
        %v764 = vand.u32 2147483647, %v762
        %v766 = vlaneseq
        %v767 = vshrl.u32 %v766, 7
        %v768 = vsub.s32 0, %v767
        %v769 = vrot.slane %v452, %v768
        %770 = vset.pattern.permute.xlu0 0
        %771 = vperm.xlu0 %770, %v769
        %v772 = vpop.permute.xlu0 %771
        %v774 = vmul.f32 %v763, %v772
        %v775 = vmul.f32 %v764, %v772
        %v776 = vsub.f32 %v628, %v635
        %v777 = vsub.f32 %v632, %v635
        %v778 = vand.u32 2147483647, %v776
        %v779 = vand.u32 2147483647, %v777
        %780 = vset.pattern.permute.xlu0 1
        %781 = vperm.xlu0 %780, %v769
        %v782 = vpop.permute.xlu0 %781
        %v784 = vmul.f32 %v778, %v782
        %v785 = vmul.f32 %v779, %v782
        %v786 = vadd.f32 %v774, %v784
        %v787 = vadd.f32 %v775, %v785
        %v788 = vsub.f32 %v652, %v659
        %v789 = vsub.f32 %v656, %v659
        %v790 = vand.u32 2147483647, %v788
        %v791 = vand.u32 2147483647, %v789
        %792 = vset.pattern.permute.xlu0 2
        %793 = vperm.xlu0 %792, %v769
        %v794 = vpop.permute.xlu0 %793
        %v796 = vmul.f32 %v790, %v794
        %v797 = vmul.f32 %v791, %v794
        %v798 = vadd.f32 %v786, %v796
        %v799 = vadd.f32 %v787, %v797
        %v800 = vsub.f32 %v676, %v683
        %v801 = vsub.f32 %v680, %v683
        %v802 = vand.u32 2147483647, %v800
        %v803 = vand.u32 2147483647, %v801
        %804 = vset.pattern.permute.xlu0 3
        %805 = vperm.xlu0 %804, %v769
        %v806 = vpop.permute.xlu0 %805
        %v808 = vmul.f32 %v802, %v806
        %v809 = vmul.f32 %v803, %v806
        %v810 = vadd.f32 %v798, %v808
        %v811 = vadd.f32 %v799, %v809
        %v812 = vrot.slane %v573, 4
        %v814 = vadd.f32 %v449, %v812
        %v815 = vmul.f32 %v814, 0.5
        %v817 = vlaneseq
        %v818 = vshrl.u32 %v817, 7
        %v819 = vsub.s32 0, %v818
        %v820 = vrot.slane %v815, %v819
        %v821 = vlaneseq
        %v822 = vshrl.u32 %v821, 7
        %v823 = vsub.s32 4, %v822
        %v824 = vrot.slane %v815, %v823
        %v827 = vlaneseq
        %v828 = vshrl.u32 %v827, 7
        %v829 = vsub.s32 0, %v828
        %v830 = vrot.slane %v820, %v829
        %v831 = vlaneseq
        %v832 = vshrl.u32 %v831, 7
        %v833 = vsub.s32 0, %v832
        %v834 = vrot.slane %v824, %v833
        %vm835 = vcmp.gt.f32.partialorder %v830, %v611
        %vm836 = vcmp.gt.f32.partialorder %v834, %v611
        %vm837 = vcmp.lt.f32.partialorder %v830, %v659
        %vm838 = vcmp.lt.f32.partialorder %v834, %v659
        %vm839 = vmand %vm835, %vm837
        %vm840 = vmand %vm836, %vm838
        %v841 = vlaneseq
        %v842 = vshrl.u32 %v841, 7
        %v843 = vsub.s32 1, %v842
        %v844 = vrot.slane %v815, %v843
        %v845 = vlaneseq
        %v846 = vshrl.u32 %v845, 7
        %v847 = vsub.s32 5, %v846
        %v848 = vrot.slane %v815, %v847
        %v851 = vlaneseq
        %v852 = vshrl.u32 %v851, 7
        %v853 = vsub.s32 1, %v852
        %v854 = vrot.slane %v844, %v853
        %v855 = vlaneseq
        %v856 = vshrl.u32 %v855, 7
        %v857 = vsub.s32 1, %v856
        %v858 = vrot.slane %v848, %v857
        %vm859 = vcmp.gt.f32.partialorder %v854, %v635
        %vm860 = vcmp.gt.f32.partialorder %v858, %v635
        %vm861 = vmand %vm839, %vm859
        %vm862 = vmand %vm840, %vm860
        %vm863 = vcmp.lt.f32.partialorder %v854, %v683
        %vm864 = vcmp.lt.f32.partialorder %v858, %v683
        %vm865 = vmand %vm861, %vm863
        %vm866 = vmand %vm862, %vm864
        %867 = vrot.lane.b32.xlu0 %v451, 126
        %v868 = vpop.permute.xlu0 %867
        %v870 = vadd.f32 %v451, %v868
        %v871 = vmul.f32 %v870, 0.5
        %v872 = vmul.f32 %v585, 2.5
        %874 = vrot.lane.b32.xlu0 %v872, 126
        %v875 = vpop.permute.xlu0 %874
        %v877 = vsub.f32 %v871, %v875
        %879 = vset.pattern.permute.xlu0 0
        %880 = vperm.xlu0 %879, %v877
        %v881 = vpop.permute.xlu0 %880
        %vm883 = vcmp.gt.f32.partialorder %v830, %v881
        %vm884 = vcmp.gt.f32.partialorder %v834, %v881
        %v885 = vadd.f32 %v871, %v875
        %887 = vset.pattern.permute.xlu0 0
        %888 = vperm.xlu0 %887, %v885
        %v889 = vpop.permute.xlu0 %888
        %vm891 = vcmp.lt.f32.partialorder %v830, %v889
        %vm892 = vcmp.lt.f32.partialorder %v834, %v889
        %vm893 = vmand %vm883, %vm891
        %vm894 = vmand %vm884, %vm892
        %895 = vset.pattern.permute.xlu0 1
        %896 = vperm.xlu0 %895, %v877
        %v897 = vpop.permute.xlu0 %896
        %vm899 = vcmp.gt.f32.partialorder %v854, %v897
        %vm900 = vcmp.gt.f32.partialorder %v858, %v897
        %vm901 = vmand %vm893, %vm899
        %vm902 = vmand %vm894, %vm900
        %903 = vset.pattern.permute.xlu0 1
        %904 = vperm.xlu0 %903, %v885
        %v905 = vpop.permute.xlu0 %904
        %vm907 = vcmp.lt.f32.partialorder %v854, %v905
        %vm908 = vcmp.lt.f32.partialorder %v858, %v905
        %vm909 = vmand %vm901, %vm907
        %vm910 = vmand %vm902, %vm908
        %v911 = vsel %vm865, 1, 0
        %v912 = vsel %vm866, 1, 0
        %v913 = vcvt.s32.f32 %v911
        %v914 = vcvt.s32.f32 %v912
        %v915 = vsel %vm909, 1, 0
        %v916 = vsel %vm910, 1, 0
        %v917 = vcvt.s32.f32 %v915
        %v918 = vcvt.s32.f32 %v916
        %v919 = vrot.slane %v913, 4
        %v920 = vadd.f32 %v913, %v919
        %v921 = vrot.slane %v920, 2
        %v922 = vadd.f32 %v920, %v921
        %v923 = vrot.slane %v922, 1
        %v924 = vadd.f32 %v922, %v923
        %v925 = vrot.slane %v914, 4
        %v926 = vadd.f32 %v914, %v925
        %v927 = vrot.slane %v926, 2
        %v928 = vadd.f32 %v926, %v927
        %v929 = vrot.slane %v928, 1
        %v930 = vadd.f32 %v928, %v929
        %vm931 = vcmp.gt.f32.partialorder %v924, 0.0
        %vm932 = vcmp.gt.f32.partialorder %v930, 0.0
        %v933 = vrot.slane %v917, 4
        %v934 = vadd.f32 %v917, %v933
        %v935 = vrot.slane %v934, 2
        %v936 = vadd.f32 %v934, %v935
        %v937 = vrot.slane %v936, 1
        %v938 = vadd.f32 %v936, %v937
        %v939 = vrot.slane %v918, 4
        %v940 = vadd.f32 %v918, %v939
        %v941 = vrot.slane %v940, 2
        %v942 = vadd.f32 %v940, %v941
        %v943 = vrot.slane %v942, 1
        %v944 = vadd.f32 %v942, %v943
        %vm945 = vcmp.gt.f32.partialorder %v938, 0.0
        %vm946 = vcmp.gt.f32.partialorder %v944, 0.0
        %vm947 = vmor %vm931, %vm945
        %vm948 = vmor %vm932, %vm946
        %v949 = vsel %vm947, 1, 0
        %v950 = vsel %vm948, 1, 0
        %v951 = vcvt.s32.f32 %v949
        %v952 = vcvt.s32.f32 %v950
        %v953 = vmul.f32 %v913, %v917
        %v954 = vmul.f32 %v914, %v918
        %v955 = vadd.f32 %v810, %v570
        %v956 = vadd.f32 %v811, %v571
        %v957 = vadd.f32 %v955, %v759
        %v958 = vadd.f32 %v956, %v760
        %v959 = vsub.f32 1.0, %v953
        %v960 = vsub.f32 1.0, %v954
        %v961 = vmul.f32 %v959, 100.0
        %v962 = vmul.f32 %v960, 100.0
        %v963 = vadd.f32 %v957, %v961
        %v964 = vadd.f32 %v958, %v962
        %v965 = vsub.f32 1.0, %v951
        %v966 = vsub.f32 1.0, %v952
        %v967 = vmul.f32 %v965, 10000.0
        %v968 = vmul.f32 %v966, 10000.0
        %v969 = vadd.f32 %v963, %v967
        %v970 = vadd.f32 %v964, %v968
        %971 = vst [vmem:[%s409] sm:$0xff] %v969
        %972 = vst [vmem:[%s409 + $0x8] sm:$0xff] %v970
        %973 = vst [vmem:[%s416] sm:$0xff] %v729
        %974 = vst [vmem:[%s416 + $0x8] sm:$0xff] %v730
        %v977 = vcombine.low %v951, %v952
        %v979 = vunpack.c.l.s4 1966171168
        %v980 = vunpack.c.0.s8 %v979
        %v981 = vlaneseq
        %v982 = vshrl.u32 %v981, 7
        %v983 = vsub.s32 %v980, %v982
        %v984 = vrot.slane %v977, %v983
        %v986 = vunpack.c.l.s4 1966171168
        %v987 = vunpack.c.0.s8 %v986
        %v988 = vlaneseq
        %v989 = vshrl.u32 %v988, 7
        %v990 = vsub.s32 %v987, %v989
        %v991 = vrot.slane %v984, %v990
        %v993 = vlaneseq
        %vm994 = vcmp.ge.s32.totalorder %v993, 0
        %vm995 = vcmp.lt.s32.totalorder %v993, 256
        %vm996 = vmand %vm994, %vm995
        %997 = vst.msk [vmem:[%s423] sm:$0x3] %vm996, %v991
        %s998 = sand.u32 %s187, 1
        %s999 = scalar_lea.sflag [#allocation4], %s998
        %s1000 = sand.u32 %s187, 1
        %s1001 = smul.addr %s1000, 16
        %s1002 = scalar_lea.vmem [#allocation7], %s1001
        %s1003 = sand.u32 %s31, 1
        %s1004 = scalar_lea.sflag [#allocation9], %s1003
        %s1005 = sand.u32 %s215, 1
        %s1006 = smul.addr %s1005, 16
        %s1007 = scalar_lea.vmem [#allocation8], %s1006
        %s1008 = sand.u32 %s31, 1
        %s1009 = scalar_lea.sflag [#allocation9], %s1008
        %s1010 = sand.u32 %s243, 1
        %s1011 = smul.addr %s1010, 2
        %s1012 = scalar_lea.vmem [#allocation10], %s1011
        // Predicated region
        $region49: #{matcher_cost_pallas.1} parent=39 // pred_check
          %p1013 = pneg %p197
        $region50: #{matcher_cost_pallas.1} parent=39 // pred_check_branch
          %1015 = sbr.rel (%p1013) target = $region52
        $region51: #{matcher_cost_pallas.1} parent=39 // pred_region
          %s1016 = smul.u32 2, %s36
          %s1018 = ssub.s32 256, 256
          %1019 = vsyncadd %s999, %s1018
          %s1020 = smul.addr %s35, 2
          %s1021 = sadd.s32 %s1016, %s1020
          %s1022 = smul.addr %s1021, 128
          %s1023 = scalar_lea.hbm %s5, %s1022
          %s1025 = sshll.u32 %s1002, 4
          %s1026 = int_to_ptr.vmem [resolvable:$true] %s1025
          %1028 = dma.vmem_to_hbm [thread:$0]  %s1026, 256, %s1023, %s999
        $region52: #{matcher_cost_pallas.1} parent=39 // pred_fallthru
          _
        // Predicated region
        $region53: #{matcher_cost_pallas.1} parent=39 // pred_check
          %p1029 = pneg %p225
        $region54: #{matcher_cost_pallas.1} parent=39 // pred_check_branch
          %1031 = sbr.rel (%p1029) target = $region56
        $region55: #{matcher_cost_pallas.1} parent=39 // pred_region
          %s1032 = smul.u32 2, %s36
          %s1034 = ssub.s32 256, 256
          %1035 = vsyncadd %s1004, %s1034
          %s1036 = smul.addr %s35, 2
          %s1037 = sadd.s32 %s1032, %s1036
          %s1038 = smul.addr %s1037, 128
          %s1039 = scalar_lea.hbm %s6, %s1038
          %s1041 = sshll.u32 %s1007, 4
          %s1042 = int_to_ptr.vmem [resolvable:$true] %s1041
          %1044 = dma.vmem_to_hbm [thread:$0]  %s1042, 256, %s1039, %s1004
        $region56: #{matcher_cost_pallas.1} parent=39 // pred_fallthru
          _
        // Predicated region
        $region57: #{matcher_cost_pallas.1} parent=39 // pred_check
          %p1045 = pneg %p253
        $region58: #{matcher_cost_pallas.1} parent=39 // pred_check_branch
          %1047 = sbr.rel (%p1045) target = $region60
        $region59: #{matcher_cost_pallas.1} parent=39 // pred_region
          %s1048 = smul.u32 2, %s36
          %s1050 = ssub.s32 32, 32
          %1051 = vsyncadd %s1009, %s1050
          %s1052 = smul.addr %s35, 2
          %s1053 = sadd.s32 %s1048, %s1052
          %s1054 = smul.addr %s1053, 16
          %s1055 = scalar_lea.hbm %s7, %s1054
          %s1057 = sshll.u32 %s1012, 4
          %s1058 = int_to_ptr.vmem [resolvable:$true] %s1057
          %1060 = dma.vmem_to_hbm [thread:$0]  %s1058, 32, %s1055, %s1009
        $region60: #{matcher_cost_pallas.1} parent=39 // pred_fallthru
          _
      $region40: #{matcher_cost_pallas.1} parent=5 // pred_fallthru
        _
      %p1061 = scmp.le.s32.totalorder 2, %s26
      // Predicated region
      $region61: #{matcher_cost_pallas.1} parent=5 // pred_check
        %p1062 = pneg %p1061
      $region62: #{matcher_cost_pallas.1} parent=5 // pred_check_branch
        %1064 = sbr.rel (%p1062) target = $region64
      $region63: #{matcher_cost_pallas.1} parent=5 // pred_region
        %s1065 = ssub.s32 %s26, 2
        // Predicated region
        $region65: #{matcher_cost_pallas.1} parent=63 // pred_check
          %p1066 = pneg %p203
        $region66: #{matcher_cost_pallas.1} parent=63 // pred_check_branch
          %1068 = sbr.rel (%p1066) target = $region68
        $region67: #{matcher_cost_pallas.1} parent=63 // pred_region
          %s1069 = sand.u32 %s188, 1
          %s1070 = scalar_lea.sflag [#allocation4], %s1069
          %s1071 = sand.u32 %s188, 1
          %s1072 = smul.addr %s1071, 16
          %s1073 = scalar_lea.vmem [#allocation7], %s1072
          %1074 = dma.done %s1070, 256
        $region68: #{matcher_cost_pallas.1} parent=63 // pred_fallthru
          _
        // Predicated region
        $region69: #{matcher_cost_pallas.1} parent=63 // pred_check
          %p1075 = pneg %p231
        $region70: #{matcher_cost_pallas.1} parent=63 // pred_check_branch
          %1077 = sbr.rel (%p1075) target = $region72
        $region71: #{matcher_cost_pallas.1} parent=63 // pred_region
          %s1078 = sand.u32 %s32, 1
          %s1079 = scalar_lea.sflag [#allocation9], %s1078
          %s1080 = sand.u32 %s216, 1
          %s1081 = smul.addr %s1080, 16
          %s1082 = scalar_lea.vmem [#allocation8], %s1081
          %1083 = dma.done %s1079, 256
        $region72: #{matcher_cost_pallas.1} parent=63 // pred_fallthru
          _
        // Predicated region
        $region73: #{matcher_cost_pallas.1} parent=63 // pred_check
          %p1084 = pneg %p259
        $region74: #{matcher_cost_pallas.1} parent=63 // pred_check_branch
          %1086 = sbr.rel (%p1084) target = $region76
        $region75: #{matcher_cost_pallas.1} parent=63 // pred_region
          %s1087 = sand.u32 %s32, 1
          %s1088 = scalar_lea.sflag [#allocation9], %s1087
          %s1089 = sand.u32 %s244, 1
          %s1090 = smul.addr %s1089, 2
          %s1091 = scalar_lea.vmem [#allocation10], %s1090
          %1092 = dma.done %s1088, 32
        $region76: #{matcher_cost_pallas.1} parent=63 // pred_fallthru
          _
      $region64: #{matcher_cost_pallas.1} parent=5 // pred_fallthru
        _
    $region6: #{matcher_cost_pallas.1} parent=1 // loop_footer
      %s30 = sadd.s32 1, %s26
    $region7: #{matcher_cost_pallas.1} parent=1 // loop_footer_branch
      %25 = sbr.rel target = $region3
    $region8: #{matcher_cost_pallas.1} parent=1 // loop_exit
      _
    %1093 = vsyncpa [#allocation3], 1
    %s1094 = scalar_lea.sflag [#allocation3], 1
    %1095 = vsyncpa %s1094, 1
    %1096 = vsyncpa [#allocation6], 1
    %s1097 = scalar_lea.sflag [#allocation6], 1
    %1098 = vsyncpa %s1097, 1
    %1099 = vsyncpa [#allocation4], 1
    %s1100 = scalar_lea.sflag [#allocation4], 1
    %1101 = vsyncpa %s1100, 1
    %1102 = vsyncpa [#allocation9], 1
    %s1103 = scalar_lea.sflag [#allocation9], 1
    %1104 = vsyncpa %s1103, 1

</llo_original>
